<compile_context>
chip_gen: v5e
topology: v5e:2x2
jax: 0.10.0
libtpu: 0.0.40
codegen_flags: <defaults>
</compile_context>

<pallas_src>
import functools

import jax
import jax.numpy as jnp
from jax.experimental import pallas as pl
from jax.experimental.pallas import tpu as pltpu


def _round_up(x, m):
    return ((x + m - 1) // m) * m


# ----------------------------------------------------------------------------
# Pallas kernel: fused concat + full MLP (linear -> relu -> ... -> sigmoid)
# ----------------------------------------------------------------------------
def _rendering_mlp_kernel(n_groups, n_lin, squeeze_out, *refs):
    """refs = (x_0..x_{G-1}, w0_0..w0_{G-1}, b0, w1, b1, ..., out_ref)."""
    out_ref = refs[-1]
    x_refs = refs[:n_groups]
    w0_refs = refs[n_groups:2 * n_groups]
    b0_ref = refs[2 * n_groups]
    rest = refs[2 * n_groups + 1:-1]  # (w1, b1, w2, b2, ...)

    # Layer 0: concat fused away -- sum of per-group partial matmuls on the
    # MXU, accumulated in f32.
    acc = jnp.dot(x_refs[0][...], w0_refs[0][...],
                  preferred_element_type=jnp.float32)
    for g in range(1, n_groups):
        acc = acc + jnp.dot(x_refs[g][...], w0_refs[g][...],
                            preferred_element_type=jnp.float32)
    x = acc + b0_ref[...]                       # bias in f32
    if n_lin > 1:
        x = jnp.maximum(x, 0.0)                 # ReLU in f32

    # Remaining layers (all lane-dense 128-multiple widths except the last).
    for l in range(1, n_lin):
        w = rest[2 * (l - 1)][...]              # bf16 weights
        b = rest[2 * (l - 1) + 1][...]          # f32 bias
        x = jnp.dot(x.astype(w.dtype), w,
                    preferred_element_type=jnp.float32) + b
        if l < n_lin - 1:
            x = jnp.maximum(x, 0.0)

    if squeeze_out:
        x = jax.nn.sigmoid(x)                   # EUP logistic
    out_ref[...] = x.astype(out_ref.dtype)


# ----------------------------------------------------------------------------
# Parameter preparation: hidden-dim padding to 128 lanes, first-layer split
# by input group, bf16 weights / f32 biases.
# ----------------------------------------------------------------------------
def _prepare_params(weights, biases, group_sizes, compute_dtype, hidden_pad):
    n_lin = len(weights)
    out_dims = [int(w.shape[1]) for w in weights]
    # Pad the output dim of every layer except the last (exact zero-padding).
    pad_out = [_round_up(d, hidden_pad) if l < n_lin - 1 else d
               for l, d in enumerate(out_dims)]
    pad_in = [sum(group_sizes)] + pad_out[:-1]

    padded_w, padded_b = [], []
    for l, (w, b) in enumerate(zip(weights, biases)):
        in_d, out_d = int(w.shape[0]), int(w.shape[1])
        w_p = jnp.zeros((pad_in[l], pad_out[l]), jnp.float32)
        w_p = w_p.at[:in_d, :out_d].set(w.astype(jnp.float32))
        b_p = jnp.zeros((1, pad_out[l]), jnp.float32)
        b_p = b_p.at[:, :out_d].set(jnp.reshape(b, (1, -1)).astype(jnp.float32))
        padded_w.append(w_p.astype(compute_dtype))   # bf16 weights
        padded_b.append(b_p)                          # f32 biases

    # Split first-layer weight by input-group rows (fuses the concat).
    w0_splits, off = [], 0
    for g in group_sizes:
        w0_splits.append(padded_w[0][off:off + g, :])
        off += g
    return w0_splits, padded_b[0], padded_w[1:], padded_b[1:]


# ----------------------------------------------------------------------------
# Forward wrapper
# ----------------------------------------------------------------------------
def rendering_network_forward(input_groups, weights, biases, *,
                              squeeze_out=True, tile_b=1024,
                              compute_dtype=jnp.bfloat16, hidden_pad=128):
    """input_groups: list of (N, d_g) arrays in concat order (mode='all':
    [points, view_dirs, sun_dirs, normals, feature_vectors]).
    weights[l]: (in_dim_l, out_dim_l), biases[l]: (1, out_dim_l) or (out_dim_l,)."""
    group_sizes = [int(a.shape[-1]) for a in input_groups]
    n = int(input_groups[0].shape[0])
    n_lin = len(weights)
    d_out = int(weights[-1].shape[1])
    assert sum(group_sizes) == int(weights[0].shape[0])

    w0_splits, b0, rest_w, rest_b = _prepare_params(
        weights, biases, group_sizes, compute_dtype, hidden_pad)

    # Batch tiling: big tiles, clamp to the batch, pad N to a tile multiple.
    tile_b = max(8, min(_round_up(tile_b, 8), _round_up(n, 8)))
    n_pad = _round_up(n, tile_b)
    xs = []
    for a in input_groups:
        a = a.astype(compute_dtype)
        if n_pad != n:
            a = jnp.pad(a, ((0, n_pad - n), (0, 0)))
        xs.append(a)

    # Block specs. Batch-tiled inputs iterate with the grid; params use a
    # constant block index so the pipeline keeps them VMEM-resident.
    in_specs = [pl.BlockSpec((tile_b, g), lambda i: (i, 0)) for g in group_sizes]
    args = list(xs)
    for w in w0_splits:
        in_specs.append(pl.BlockSpec(tuple(w.shape), lambda i: (0, 0)))
        args.append(w)
    in_specs.append(pl.BlockSpec(tuple(b0.shape), lambda i: (0, 0)))
    args.append(b0)
    for w, b in zip(rest_w, rest_b):
        in_specs.append(pl.BlockSpec(tuple(w.shape), lambda i: (0, 0)))
        args.append(w)
        in_specs.append(pl.BlockSpec(tuple(b.shape), lambda i: (0, 0)))
        args.append(b)
    out_spec = pl.BlockSpec((tile_b, d_out), lambda i: (i, 0))

    # Advisory cost estimate (lets XLA schedule around the call).
    padded_dims = ([(sum(group_sizes), int(w0_splits[0].shape[1]))]
                   + [tuple(map(int, w.shape)) for w in rest_w])
    itemsize = jnp.dtype(compute_dtype).itemsize
    bytes_params = (sum(int(w.size) * itemsize for w in w0_splits + list(rest_w))
                    + sum(int(b.size) * 4 for b in [b0] + list(rest_b)))
    cost = pl.CostEstimate(
        flops=2 * n_pad * sum(i * o for i, o in padded_dims),
        transcendentals=(n_pad * d_out) if squeeze_out else 0,
        bytes_accessed=(n_pad * sum(group_sizes) * itemsize
                        + bytes_params + n_pad * d_out * 4))

    # Explicit VMEM budget: double-buffered batch tiles + f32 intermediates +
    # resident params. Kept within every generation's limits (v5e 16 MiB
    # scoped default, v7x 64 MiB physical).
    max_h = max(o for _, o in padded_dims)
    vmem_est = (2 * tile_b * sum(group_sizes) * itemsize   # input tiles (x2 buf)
                + 2 * tile_b * d_out * 4                   # output tiles (x2 buf)
                + 4 * tile_b * max_h * 4                   # f32 activations slack
                + 2 * bytes_params)                        # resident params
    vmem_limit = int(min(max(vmem_est + (8 << 20), 24 << 20), 56 << 20))

    out = pl.pallas_call(
        functools.partial(_rendering_mlp_kernel, len(group_sizes), n_lin,
                          squeeze_out),
        out_shape=jax.ShapeDtypeStruct((n_pad, d_out), jnp.float32),
        grid_spec=pltpu.PrefetchScalarGridSpec(
            num_scalar_prefetch=0,
            grid=(n_pad // tile_b,),
            in_specs=in_specs,
            out_specs=out_spec,
        ),
        compiler_params=pltpu.CompilerParams(
            dimension_semantics=("parallel",),
            vmem_limit_bytes=vmem_limit,
        ),
        cost_estimate=cost,
    )(*args)
    return out[:n] if n_pad != n else out


# ----------------------------------------------------------------------------
# Parameter setup (deterministic), mimicking nn.Linear + nn.utils.weight_norm
# ----------------------------------------------------------------------------
def init_rendering_network_params(key, d_feature, d_in, d_out, d_hidden,
                                  n_layers, weight_norm=True):
    dims = [d_in + d_feature] + [d_hidden] * n_layers + [d_out]
    num_layers = len(dims)
    weights, biases = [], []
    for l in range(num_layers - 1):
        in_dim, out_dim = dims[l], dims[l + 1]
        key, kv, kg, kb = jax.random.split(key, 4)
        bound = 1.0 / jnp.sqrt(in_dim)
        v = jax.random.uniform(kv, (out_dim, in_dim), jnp.float32, -bound, bound)
        b = jax.random.uniform(kb, (out_dim,), jnp.float32, -bound, bound)
        if weight_norm:
            g = jax.random.uniform(kg, (out_dim,), jnp.float32, 0.5, 1.5)
            norm = jnp.sqrt(jnp.sum(v * v, axis=1, keepdims=True))  # per out row
            w_eff = g[:, None] * v / norm
        else:
            w_eff = v
        weights.append(jnp.transpose(w_eff))          # (in_dim, out_dim)
        biases.append(b.reshape(1, out_dim))          # (1, out_dim)
    return weights, biases


# ----------------------------------------------------------------------------
# Pure-JAX reference (matches kernel math: bf16 operands, f32 accumulation)
# ----------------------------------------------------------------------------
def reference_forward(input_groups, weights, biases, squeeze_out=True,
                      compute_dtype=jnp.bfloat16):
    x = jnp.concatenate([a.astype(compute_dtype) for a in input_groups], axis=-1)
    n_lin = len(weights)
    for l in range(n_lin):
        w = weights[l].astype(compute_dtype)
        b = jnp.reshape(biases[l], (1, -1)).astype(jnp.float32)
        x = jnp.dot(x, w, preferred_element_type=jnp.float32) + b
        if l < n_lin - 1:
            x = jnp.maximum(x, 0.0).astype(compute_dtype)
    if squeeze_out:
        x = jax.nn.sigmoid(x)
    return x


if __name__ == "__main__":
    # Small, module-consistent shapes.
    N = 256            # number of rays/points
    d_feature = 32
    d_in = 12          # points(3) + view_dirs(3) + sun_dirs(3) + normals(3)
    d_out = 3
    d_hidden = 64
    n_layers = 2
    squeeze_out = True

    key = jax.random.PRNGKey(0)
    key, k1, k2, k3, k4, k5, kp = jax.random.split(key, 7)

    points = jax.random.normal(k1, (N, 3), jnp.float32)
    normals = jax.random.normal(k2, (N, 3), jnp.float32)
    view_dirs = jax.random.normal(k3, (N, 3), jnp.float32)
    sun_dirs = jax.random.normal(k4, (N, 3), jnp.float32)
    feature_vectors = jax.random.normal(k5, (N, d_feature), jnp.float32)

    # mode == 'all': concat order is [points, view_dirs, sun_dirs, normals,
    # feature_vectors]; the concat itself is fused into the kernel.
    input_groups = [points, view_dirs, sun_dirs, normals, feature_vectors]

    weights, biases = init_rendering_network_params(
        kp, d_feature, d_in, d_out, d_hidden, n_layers, weight_norm=True)

    out = rendering_network_forward(
        input_groups, weights, biases,
        squeeze_out=squeeze_out, tile_b=1024,        # sweep parameter
        compute_dtype=jnp.bfloat16, hidden_pad=128)
    out = jax.block_until_ready(out)

    ref = reference_forward(input_groups, weights, biases, squeeze_out)
    assert out.shape == (N, d_out)
    assert jnp.max(jnp.abs(out - ref.astype(jnp.float32))) < 1e-2, \
        "mismatch vs pure-JAX reference"

    print("KERNEL_OK")
</pallas_src>

<mosaic_0001>
module attributes {stable_mosaic.version = 11 : i64} {
  func.func @_rendering_mlp_kernel(%arg0: i32, %arg1: memref<256x3xbf16, #tpu.memory_space<vmem>>, %arg2: memref<256x3xbf16, #tpu.memory_space<vmem>>, %arg3: memref<256x3xbf16, #tpu.memory_space<vmem>>, %arg4: memref<256x3xbf16, #tpu.memory_space<vmem>>, %arg5: memref<256x32xbf16, #tpu.memory_space<vmem>>, %arg6: memref<3x128xbf16, #tpu.memory_space<vmem>>, %arg7: memref<3x128xbf16, #tpu.memory_space<vmem>>, %arg8: memref<3x128xbf16, #tpu.memory_space<vmem>>, %arg9: memref<3x128xbf16, #tpu.memory_space<vmem>>, %arg10: memref<32x128xbf16, #tpu.memory_space<vmem>>, %arg11: memref<1x128xf32, #tpu.memory_space<vmem>>, %arg12: memref<128x128xbf16, #tpu.memory_space<vmem>>, %arg13: memref<1x128xf32, #tpu.memory_space<vmem>>, %arg14: memref<128x3xbf16, #tpu.memory_space<vmem>>, %arg15: memref<1x3xf32, #tpu.memory_space<vmem>>, %arg16: memref<256x3xf32, #tpu.memory_space<vmem>>) attributes {dimension_semantics = [#tpu.dimension_semantics<parallel>], iteration_bounds = array<i64: 1>, scalar_prefetch = 0 : i64, scratch_operands = 0 : i64, tpu.core_type = #tpu.core_type<tc>, window_params = [{transform_indices = @transform_0, window_bounds = array<i64: 256, 3>}, {transform_indices = @transform_1, window_bounds = array<i64: 256, 3>}, {transform_indices = @transform_2, window_bounds = array<i64: 256, 3>}, {transform_indices = @transform_3, window_bounds = array<i64: 256, 3>}, {transform_indices = @transform_4, window_bounds = array<i64: 256, 32>}, {pipeline_mode = #tpu.pipeline_mode<synchronous>, transform_indices = @transform_5, window_bounds = array<i64: 3, 128>}, {pipeline_mode = #tpu.pipeline_mode<synchronous>, transform_indices = @transform_6, window_bounds = array<i64: 3, 128>}, {pipeline_mode = #tpu.pipeline_mode<synchronous>, transform_indices = @transform_7, window_bounds = array<i64: 3, 128>}, {pipeline_mode = #tpu.pipeline_mode<synchronous>, transform_indices = @transform_8, window_bounds = array<i64: 3, 128>}, {pipeline_mode = #tpu.pipeline_mode<synchronous>, transform_indices = @transform_9, window_bounds = array<i64: 32, 128>}, {pipeline_mode = #tpu.pipeline_mode<synchronous>, transform_indices = @transform_10, window_bounds = array<i64: 1, 128>}, {pipeline_mode = #tpu.pipeline_mode<synchronous>, transform_indices = @transform_11, window_bounds = array<i64: 128, 128>}, {pipeline_mode = #tpu.pipeline_mode<synchronous>, transform_indices = @transform_12, window_bounds = array<i64: 1, 128>}, {pipeline_mode = #tpu.pipeline_mode<synchronous>, transform_indices = @transform_13, window_bounds = array<i64: 128, 3>}, {pipeline_mode = #tpu.pipeline_mode<synchronous>, transform_indices = @transform_14, window_bounds = array<i64: 1, 3>}, {transform_indices = @transform_15, window_bounds = array<i64: 256, 3>}]} {
    %c0 = arith.constant 0 : index
    %c0_0 = arith.constant 0 : index
    %0 = vector.load %arg1[%c0, %c0_0] : memref<256x3xbf16, #tpu.memory_space<vmem>>, vector<256x3xbf16>
    %c0_1 = arith.constant 0 : index
    %c0_2 = arith.constant 0 : index
    %1 = vector.load %arg6[%c0_1, %c0_2] : memref<3x128xbf16, #tpu.memory_space<vmem>>, vector<3x128xbf16>
    %cst = arith.constant dense<0.000000e+00> : vector<256x128xf32>
    %2 = tpu.matmul %0, %1, %cst {dimension_numbers = #tpu.dot_dimension_numbers<[1], [0], [0], [1], [0, 0, 1, 1], [], []>} : vector<256x3xbf16>, vector<3x128xbf16>, vector<256x128xf32> -> vector<256x128xf32>
    %c0_3 = arith.constant 0 : index
    %c0_4 = arith.constant 0 : index
    %3 = vector.load %arg2[%c0_3, %c0_4] : memref<256x3xbf16, #tpu.memory_space<vmem>>, vector<256x3xbf16>
    %c0_5 = arith.constant 0 : index
    %c0_6 = arith.constant 0 : index
    %4 = vector.load %arg7[%c0_5, %c0_6] : memref<3x128xbf16, #tpu.memory_space<vmem>>, vector<3x128xbf16>
    %cst_7 = arith.constant dense<0.000000e+00> : vector<256x128xf32>
    %5 = tpu.matmul %3, %4, %cst_7 {dimension_numbers = #tpu.dot_dimension_numbers<[1], [0], [0], [1], [0, 0, 1, 1], [], []>} : vector<256x3xbf16>, vector<3x128xbf16>, vector<256x128xf32> -> vector<256x128xf32>
    %6 = arith.addf %2, %5 : vector<256x128xf32>
    %c0_8 = arith.constant 0 : index
    %c0_9 = arith.constant 0 : index
    %7 = vector.load %arg3[%c0_8, %c0_9] : memref<256x3xbf16, #tpu.memory_space<vmem>>, vector<256x3xbf16>
    %c0_10 = arith.constant 0 : index
    %c0_11 = arith.constant 0 : index
    %8 = vector.load %arg8[%c0_10, %c0_11] : memref<3x128xbf16, #tpu.memory_space<vmem>>, vector<3x128xbf16>
    %cst_12 = arith.constant dense<0.000000e+00> : vector<256x128xf32>
    %9 = tpu.matmul %7, %8, %cst_12 {dimension_numbers = #tpu.dot_dimension_numbers<[1], [0], [0], [1], [0, 0, 1, 1], [], []>} : vector<256x3xbf16>, vector<3x128xbf16>, vector<256x128xf32> -> vector<256x128xf32>
    %10 = arith.addf %6, %9 : vector<256x128xf32>
    %c0_13 = arith.constant 0 : index
    %c0_14 = arith.constant 0 : index
    %11 = vector.load %arg4[%c0_13, %c0_14] : memref<256x3xbf16, #tpu.memory_space<vmem>>, vector<256x3xbf16>
    %c0_15 = arith.constant 0 : index
    %c0_16 = arith.constant 0 : index
    %12 = vector.load %arg9[%c0_15, %c0_16] : memref<3x128xbf16, #tpu.memory_space<vmem>>, vector<3x128xbf16>
    %cst_17 = arith.constant dense<0.000000e+00> : vector<256x128xf32>
    %13 = tpu.matmul %11, %12, %cst_17 {dimension_numbers = #tpu.dot_dimension_numbers<[1], [0], [0], [1], [0, 0, 1, 1], [], []>} : vector<256x3xbf16>, vector<3x128xbf16>, vector<256x128xf32> -> vector<256x128xf32>
    %14 = arith.addf %10, %13 : vector<256x128xf32>
    %c0_18 = arith.constant 0 : index
    %c0_19 = arith.constant 0 : index
    %15 = vector.load %arg5[%c0_18, %c0_19] : memref<256x32xbf16, #tpu.memory_space<vmem>>, vector<256x32xbf16>
    %c0_20 = arith.constant 0 : index
    %c0_21 = arith.constant 0 : index
    %16 = vector.load %arg10[%c0_20, %c0_21] : memref<32x128xbf16, #tpu.memory_space<vmem>>, vector<32x128xbf16>
    %cst_22 = arith.constant dense<0.000000e+00> : vector<256x128xf32>
    %17 = tpu.matmul %15, %16, %cst_22 {dimension_numbers = #tpu.dot_dimension_numbers<[1], [0], [0], [1], [0, 0, 1, 1], [], []>} : vector<256x32xbf16>, vector<32x128xbf16>, vector<256x128xf32> -> vector<256x128xf32>
    %18 = arith.addf %14, %17 : vector<256x128xf32>
    %c0_23 = arith.constant 0 : index
    %c0_24 = arith.constant 0 : index
    %19 = vector.load %arg11[%c0_23, %c0_24] : memref<1x128xf32, #tpu.memory_space<vmem>>, vector<1x128xf32>
    %20 = vector.broadcast %19 : vector<1x128xf32> to vector<256x128xf32>
    %21 = arith.addf %18, %20 : vector<256x128xf32>
    %cst_25 = arith.constant 0.000000e+00 : f32
    %22 = vector.broadcast %cst_25 : f32 to vector<256x128xf32>
    %23 = arith.maximumf %21, %22 : vector<256x128xf32>
    %c0_26 = arith.constant 0 : index
    %c0_27 = arith.constant 0 : index
    %24 = vector.load %arg12[%c0_26, %c0_27] : memref<128x128xbf16, #tpu.memory_space<vmem>>, vector<128x128xbf16>
    %c0_28 = arith.constant 0 : index
    %c0_29 = arith.constant 0 : index
    %25 = vector.load %arg13[%c0_28, %c0_29] : memref<1x128xf32, #tpu.memory_space<vmem>>, vector<1x128xf32>
    %26 = arith.truncf %23 : vector<256x128xf32> to vector<256x128xbf16>
    %cst_30 = arith.constant dense<0.000000e+00> : vector<256x128xf32>
    %27 = tpu.matmul %26, %24, %cst_30 {dimension_numbers = #tpu.dot_dimension_numbers<[1], [0], [0], [1], [0, 0, 1, 1], [], []>} : vector<256x128xbf16>, vector<128x128xbf16>, vector<256x128xf32> -> vector<256x128xf32>
    %28 = vector.broadcast %25 : vector<1x128xf32> to vector<256x128xf32>
    %29 = arith.addf %27, %28 : vector<256x128xf32>
    %cst_31 = arith.constant 0.000000e+00 : f32
    %30 = vector.broadcast %cst_31 : f32 to vector<256x128xf32>
    %31 = arith.maximumf %29, %30 : vector<256x128xf32>
    %c0_32 = arith.constant 0 : index
    %c0_33 = arith.constant 0 : index
    %32 = vector.load %arg14[%c0_32, %c0_33] : memref<128x3xbf16, #tpu.memory_space<vmem>>, vector<128x3xbf16>
    %c0_34 = arith.constant 0 : index
    %c0_35 = arith.constant 0 : index
    %33 = vector.load %arg15[%c0_34, %c0_35] : memref<1x3xf32, #tpu.memory_space<vmem>>, vector<1x3xf32>
    %34 = arith.truncf %31 : vector<256x128xf32> to vector<256x128xbf16>
    %cst_36 = arith.constant dense<0.000000e+00> : vector<256x3xf32>
    %35 = tpu.matmul %34, %32, %cst_36 {dimension_numbers = #tpu.dot_dimension_numbers<[1], [0], [0], [1], [0, 0, 1, 1], [], []>} : vector<256x128xbf16>, vector<128x3xbf16>, vector<256x3xf32> -> vector<256x3xf32>
    %36 = vector.broadcast %33 : vector<1x3xf32> to vector<256x3xf32>
    %37 = arith.addf %35, %36 : vector<256x3xf32>
    %38 = arith.negf %37 : vector<256x3xf32>
    %39 = math.exp %38 : vector<256x3xf32>
    %cst_37 = arith.constant 1.000000e+00 : f32
    %40 = vector.broadcast %cst_37 : f32 to vector<256x3xf32>
    %41 = arith.addf %40, %39 : vector<256x3xf32>
    %42 = arith.divf %40, %41 : vector<256x3xf32>
    %c0_38 = arith.constant 0 : index
    %c0_39 = arith.constant 0 : index
    %43 = vector.load %arg16[%c0_38, %c0_39] : memref<256x3xf32, #tpu.memory_space<vmem>>, vector<256x3xf32>
    tpu.vector_store %arg16[%c0_38, %c0_39], %42 {strides = array<i32>} : memref<256x3xf32, #tpu.memory_space<vmem>>, vector<256x3xf32>,
    return
  }
  func.func @transform_0(%arg0: i32) -> (i32, i32) {
    %c0_i32 = arith.constant 0 : i32
    %c0_i32_0 = arith.constant 0 : i32
    return %arg0, %c0_i32 : i32, i32
  }
  func.func @transform_1(%arg0: i32) -> (i32, i32) {
    %c0_i32 = arith.constant 0 : i32
    %c0_i32_0 = arith.constant 0 : i32
    return %arg0, %c0_i32 : i32, i32
  }
  func.func @transform_2(%arg0: i32) -> (i32, i32) {
    %c0_i32 = arith.constant 0 : i32
    %c0_i32_0 = arith.constant 0 : i32
    return %arg0, %c0_i32 : i32, i32
  }
  func.func @transform_3(%arg0: i32) -> (i32, i32) {
    %c0_i32 = arith.constant 0 : i32
    %c0_i32_0 = arith.constant 0 : i32
    return %arg0, %c0_i32 : i32, i32
  }
  func.func @transform_4(%arg0: i32) -> (i32, i32) {
    %c0_i32 = arith.constant 0 : i32
    %c0_i32_0 = arith.constant 0 : i32
    return %arg0, %c0_i32 : i32, i32
  }
  func.func @transform_5(%arg0: i32) -> (i32, i32) {
    %c0_i32 = arith.constant 0 : i32
    %c0_i32_0 = arith.constant 0 : i32
    %c0_i32_1 = arith.constant 0 : i32
    return %c0_i32, %c0_i32_0 : i32, i32
  }
  func.func @transform_6(%arg0: i32) -> (i32, i32) {
    %c0_i32 = arith.constant 0 : i32
    %c0_i32_0 = arith.constant 0 : i32
    %c0_i32_1 = arith.constant 0 : i32
    return %c0_i32, %c0_i32_0 : i32, i32
  }
  func.func @transform_7(%arg0: i32) -> (i32, i32) {
    %c0_i32 = arith.constant 0 : i32
    %c0_i32_0 = arith.constant 0 : i32
    %c0_i32_1 = arith.constant 0 : i32
    return %c0_i32, %c0_i32_0 : i32, i32
  }
  func.func @transform_8(%arg0: i32) -> (i32, i32) {
    %c0_i32 = arith.constant 0 : i32
    %c0_i32_0 = arith.constant 0 : i32
    %c0_i32_1 = arith.constant 0 : i32
    return %c0_i32, %c0_i32_0 : i32, i32
  }
  func.func @transform_9(%arg0: i32) -> (i32, i32) {
    %c0_i32 = arith.constant 0 : i32
    %c0_i32_0 = arith.constant 0 : i32
    %c0_i32_1 = arith.constant 0 : i32
    return %c0_i32, %c0_i32_0 : i32, i32
  }
  func.func @transform_10(%arg0: i32) -> (i32, i32) {
    %c0_i32 = arith.constant 0 : i32
    %c0_i32_0 = arith.constant 0 : i32
    %c0_i32_1 = arith.constant 0 : i32
    return %c0_i32, %c0_i32_0 : i32, i32
  }
  func.func @transform_11(%arg0: i32) -> (i32, i32) {
    %c0_i32 = arith.constant 0 : i32
    %c0_i32_0 = arith.constant 0 : i32
    %c0_i32_1 = arith.constant 0 : i32
    return %c0_i32, %c0_i32_0 : i32, i32
  }
  func.func @transform_12(%arg0: i32) -> (i32, i32) {
    %c0_i32 = arith.constant 0 : i32
    %c0_i32_0 = arith.constant 0 : i32
    %c0_i32_1 = arith.constant 0 : i32
    return %c0_i32, %c0_i32_0 : i32, i32
  }
  func.func @transform_13(%arg0: i32) -> (i32, i32) {
    %c0_i32 = arith.constant 0 : i32
    %c0_i32_0 = arith.constant 0 : i32
    %c0_i32_1 = arith.constant 0 : i32
    return %c0_i32, %c0_i32_0 : i32, i32
  }
  func.func @transform_14(%arg0: i32) -> (i32, i32) {
    %c0_i32 = arith.constant 0 : i32
    %c0_i32_0 = arith.constant 0 : i32
    %c0_i32_1 = arith.constant 0 : i32
    return %c0_i32, %c0_i32_0 : i32, i32
  }
  func.func @transform_15(%arg0: i32) -> (i32, i32) {
    %c0_i32 = arith.constant 0 : i32
    %c0_i32_0 = arith.constant 0 : i32
    return %arg0, %c0_i32 : i32, i32
  }
}

</mosaic_0001>

<llo_original>
// kernel: tpu_custom_call.1
$region0: #{tpu_custom_call.1}
  #allocation0 [shape = 'u32[]', space=smem, size = 0x4, offset = 0x4, fixed_abs, tag = 'smem constant byte address 0x4 - core index']
  #allocation1 [shape = 'u32[72,128]{1,0:T(1,128)}', space=vmem, size = 0x9000, scoped, tag = 'internal scratch']
  %s0 = inlined_call_operand.vmem [shape: bf16[256,3], index: 0, kind: input, shape index: {}]
  %s1 = inlined_call_operand.vmem [shape: bf16[256,3], index: 1, kind: input, shape index: {}]
  %s2 = inlined_call_operand.vmem [shape: bf16[256,3], index: 2, kind: input, shape index: {}]
  %s3 = inlined_call_operand.vmem [shape: bf16[256,3], index: 3, kind: input, shape index: {}]
  %s4 = inlined_call_operand.vmem [shape: bf16[256,32], index: 4, kind: input, shape index: {}]
  %s5 = inlined_call_operand.vmem [shape: bf16[3,128], index: 5, kind: input, shape index: {}]
  %s6 = inlined_call_operand.vmem [shape: bf16[3,128], index: 6, kind: input, shape index: {}]
  %s7 = inlined_call_operand.vmem [shape: bf16[3,128], index: 7, kind: input, shape index: {}]
  %s8 = inlined_call_operand.vmem [shape: bf16[3,128], index: 8, kind: input, shape index: {}]
  %s9 = inlined_call_operand.vmem [shape: bf16[32,128], index: 9, kind: input, shape index: {}]
  %s10 = inlined_call_operand.vmem [shape: f32[1,128], index: 10, kind: input, shape index: {}]
  %s11 = inlined_call_operand.vmem [shape: bf16[128,128], index: 11, kind: input, shape index: {}]
  %s12 = inlined_call_operand.vmem [shape: f32[1,128], index: 12, kind: input, shape index: {}]
  %s13 = inlined_call_operand.vmem [shape: bf16[128,3], index: 13, kind: input, shape index: {}]
  %s14 = inlined_call_operand.vmem [shape: f32[1,3], index: 14, kind: input, shape index: {}]
  %s15 = inlined_call_operand.vmem [shape: f32[256,3], index: 15, kind: output, shape index: {}]
  %s16 = sld [smem:[#allocation0]]
  $region70: #{tpu_custom_call.1} parent=0
    _
  %s18 = ssub.s32 1, %s16
  %s19 = scalar_select 0, %s18, %s16
  // Predicated region
  $region2: #{tpu_custom_call.1} parent=0 // pred_check
    _
  $region3: #{tpu_custom_call.1} parent=0 // pred_check_branch
    %21 = sbr.rel (0) target = $region5
  $region4: #{tpu_custom_call.1} parent=0 // pred_region
    _
  $region5: #{tpu_custom_call.1} parent=0 // pred_fallthru
    _
  // Predicated region
  $region6: #{tpu_custom_call.1} parent=0 // pred_check
    _
  $region7: #{tpu_custom_call.1} parent=0 // pred_check_branch
    %23 = sbr.rel (0) target = $region9
  $region8: #{tpu_custom_call.1} parent=0 // pred_region
    _
  $region9: #{tpu_custom_call.1} parent=0 // pred_fallthru
    _
  // Predicated region
  $region10: #{tpu_custom_call.1} parent=0 // pred_check
    _
  $region11: #{tpu_custom_call.1} parent=0 // pred_check_branch
    %25 = sbr.rel (0) target = $region13
  $region12: #{tpu_custom_call.1} parent=0 // pred_region
    _
  $region13: #{tpu_custom_call.1} parent=0 // pred_fallthru
    _
  // Predicated region
  $region14: #{tpu_custom_call.1} parent=0 // pred_check
    _
  $region15: #{tpu_custom_call.1} parent=0 // pred_check_branch
    %27 = sbr.rel (0) target = $region17
  $region16: #{tpu_custom_call.1} parent=0 // pred_region
    _
  $region17: #{tpu_custom_call.1} parent=0 // pred_fallthru
    _
  // Predicated region
  $region18: #{tpu_custom_call.1} parent=0 // pred_check
    _
  $region19: #{tpu_custom_call.1} parent=0 // pred_check_branch
    %29 = sbr.rel (0) target = $region21
  $region20: #{tpu_custom_call.1} parent=0 // pred_region
    _
  $region21: #{tpu_custom_call.1} parent=0 // pred_fallthru
    _
  // Predicated region
  $region22: #{tpu_custom_call.1} parent=0 // pred_check
    _
  $region23: #{tpu_custom_call.1} parent=0 // pred_check_branch
    %31 = sbr.rel (0) target = $region25
  $region24: #{tpu_custom_call.1} parent=0 // pred_region
    _
  $region25: #{tpu_custom_call.1} parent=0 // pred_fallthru
    _
  // Predicated region
  $region26: #{tpu_custom_call.1} parent=0 // pred_check
    _
  $region27: #{tpu_custom_call.1} parent=0 // pred_check_branch
    %33 = sbr.rel (0) target = $region29
  $region28: #{tpu_custom_call.1} parent=0 // pred_region
    _
  $region29: #{tpu_custom_call.1} parent=0 // pred_fallthru
    _
  // Predicated region
  $region30: #{tpu_custom_call.1} parent=0 // pred_check
    _
  $region31: #{tpu_custom_call.1} parent=0 // pred_check_branch
    %35 = sbr.rel (0) target = $region33
  $region32: #{tpu_custom_call.1} parent=0 // pred_region
    _
  $region33: #{tpu_custom_call.1} parent=0 // pred_fallthru
    _
  // Predicated region
  $region34: #{tpu_custom_call.1} parent=0 // pred_check
    _
  $region35: #{tpu_custom_call.1} parent=0 // pred_check_branch
    %37 = sbr.rel (0) target = $region37
  $region36: #{tpu_custom_call.1} parent=0 // pred_region
    _
  $region37: #{tpu_custom_call.1} parent=0 // pred_fallthru
    _
  // Predicated region
  $region38: #{tpu_custom_call.1} parent=0 // pred_check
    _
  $region39: #{tpu_custom_call.1} parent=0 // pred_check_branch
    %39 = sbr.rel (0) target = $region41
  $region40: #{tpu_custom_call.1} parent=0 // pred_region
    _
  $region41: #{tpu_custom_call.1} parent=0 // pred_fallthru
    _
  // Predicated region
  $region42: #{tpu_custom_call.1} parent=0 // pred_check
    _
  $region43: #{tpu_custom_call.1} parent=0 // pred_check_branch
    %41 = sbr.rel (0) target = $region45
  $region44: #{tpu_custom_call.1} parent=0 // pred_region
    _
  $region45: #{tpu_custom_call.1} parent=0 // pred_fallthru
    _
  // Predicated region
  $region46: #{tpu_custom_call.1} parent=0 // pred_check
    _
  $region47: #{tpu_custom_call.1} parent=0 // pred_check_branch
    %43 = sbr.rel (0) target = $region49
  $region48: #{tpu_custom_call.1} parent=0 // pred_region
    _
  $region49: #{tpu_custom_call.1} parent=0 // pred_fallthru
    _
  // Predicated region
  $region50: #{tpu_custom_call.1} parent=0 // pred_check
    _
  $region51: #{tpu_custom_call.1} parent=0 // pred_check_branch
    %45 = sbr.rel (0) target = $region53
  $region52: #{tpu_custom_call.1} parent=0 // pred_region
    _
  $region53: #{tpu_custom_call.1} parent=0 // pred_fallthru
    _
  // Predicated region
  $region54: #{tpu_custom_call.1} parent=0 // pred_check
    _
  $region55: #{tpu_custom_call.1} parent=0 // pred_check_branch
    %47 = sbr.rel (0) target = $region57
  $region56: #{tpu_custom_call.1} parent=0 // pred_region
    _
  $region57: #{tpu_custom_call.1} parent=0 // pred_fallthru
    _
  // Predicated region
  $region58: #{tpu_custom_call.1} parent=0 // pred_check
    _
  $region59: #{tpu_custom_call.1} parent=0 // pred_check_branch
    %49 = sbr.rel (0) target = $region61
  $region60: #{tpu_custom_call.1} parent=0 // pred_region
    _
  $region61: #{tpu_custom_call.1} parent=0 // pred_fallthru
    _
  %v51 = vld [vmem:[%s0] sm:$0xf]
  %v52 = vld [vmem:[%s0 + $0x4] sm:$0xf]
  %v53 = vld [vmem:[%s0 + $0x8] sm:$0xf]
  %v54 = vld [vmem:[%s0 + $0xc] sm:$0xf]
  %v55 = vld [vmem:[%s0 + $0x10] sm:$0xf]
  %v56 = vld [vmem:[%s0 + $0x14] sm:$0xf]
  %v57 = vld [vmem:[%s0 + $0x18] sm:$0xf]
  %v58 = vld [vmem:[%s0 + $0x1c] sm:$0xf]
  %v59 = vld [vmem:[%s0 + $0x20] sm:$0xf]
  %v60 = vld [vmem:[%s0 + $0x24] sm:$0xf]
  %v61 = vld [vmem:[%s0 + $0x28] sm:$0xf]
  %v62 = vld [vmem:[%s0 + $0x2c] sm:$0xf]
  %v63 = vld [vmem:[%s0 + $0x30] sm:$0xf]
  %v64 = vld [vmem:[%s0 + $0x34] sm:$0xf]
  %v65 = vld [vmem:[%s0 + $0x38] sm:$0xf]
  %v66 = vld [vmem:[%s0 + $0x3c] sm:$0xf]
  %v67 = vld [vmem:[%s0 + $0x40] sm:$0xf]
  %v68 = vld [vmem:[%s0 + $0x44] sm:$0xf]
  %v69 = vld [vmem:[%s0 + $0x48] sm:$0xf]
  %v70 = vld [vmem:[%s0 + $0x4c] sm:$0xf]
  %v71 = vld [vmem:[%s0 + $0x50] sm:$0xf]
  %v72 = vld [vmem:[%s0 + $0x54] sm:$0xf]
  %v73 = vld [vmem:[%s0 + $0x58] sm:$0xf]
  %v74 = vld [vmem:[%s0 + $0x5c] sm:$0xf]
  %v75 = vld [vmem:[%s0 + $0x60] sm:$0xf]
  %v76 = vld [vmem:[%s0 + $0x64] sm:$0xf]
  %v77 = vld [vmem:[%s0 + $0x68] sm:$0xf]
  %v78 = vld [vmem:[%s0 + $0x6c] sm:$0xf]
  %v79 = vld [vmem:[%s0 + $0x70] sm:$0xf]
  %v80 = vld [vmem:[%s0 + $0x74] sm:$0xf]
  %v81 = vld [vmem:[%s0 + $0x78] sm:$0xf]
  %v82 = vld [vmem:[%s0 + $0x7c] sm:$0xf]
  %v83 = vld [vmem:[%s5] sm:$0x3]
  %v84 = vld [vmem:[%s1] sm:$0xf]
  %v85 = vld [vmem:[%s1 + $0x4] sm:$0xf]
  %v86 = vld [vmem:[%s1 + $0x8] sm:$0xf]
  %v87 = vld [vmem:[%s1 + $0xc] sm:$0xf]
  %v88 = vld [vmem:[%s1 + $0x10] sm:$0xf]
  %v89 = vld [vmem:[%s1 + $0x14] sm:$0xf]
  %v90 = vld [vmem:[%s1 + $0x18] sm:$0xf]
  %v91 = vld [vmem:[%s1 + $0x1c] sm:$0xf]
  %v92 = vld [vmem:[%s1 + $0x20] sm:$0xf]
  %v93 = vld [vmem:[%s1 + $0x24] sm:$0xf]
  %v94 = vld [vmem:[%s1 + $0x28] sm:$0xf]
  %v95 = vld [vmem:[%s1 + $0x2c] sm:$0xf]
  %v96 = vld [vmem:[%s1 + $0x30] sm:$0xf]
  %v97 = vld [vmem:[%s1 + $0x34] sm:$0xf]
  %v98 = vld [vmem:[%s1 + $0x38] sm:$0xf]
  %v99 = vld [vmem:[%s1 + $0x3c] sm:$0xf]
  %v100 = vld [vmem:[%s1 + $0x40] sm:$0xf]
  %v101 = vld [vmem:[%s1 + $0x44] sm:$0xf]
  %v102 = vld [vmem:[%s1 + $0x48] sm:$0xf]
  %v103 = vld [vmem:[%s1 + $0x4c] sm:$0xf]
  %v104 = vld [vmem:[%s1 + $0x50] sm:$0xf]
  %v105 = vld [vmem:[%s1 + $0x54] sm:$0xf]
  %v106 = vld [vmem:[%s1 + $0x58] sm:$0xf]
  %v107 = vld [vmem:[%s1 + $0x5c] sm:$0xf]
  %v108 = vld [vmem:[%s1 + $0x60] sm:$0xf]
  %v109 = vld [vmem:[%s1 + $0x64] sm:$0xf]
  %v110 = vld [vmem:[%s1 + $0x68] sm:$0xf]
  %v111 = vld [vmem:[%s1 + $0x6c] sm:$0xf]
  %v112 = vld [vmem:[%s1 + $0x70] sm:$0xf]
  %v113 = vld [vmem:[%s1 + $0x74] sm:$0xf]
  %v114 = vld [vmem:[%s1 + $0x78] sm:$0xf]
  %v115 = vld [vmem:[%s1 + $0x7c] sm:$0xf]
  %v116 = vld [vmem:[%s6] sm:$0x3]
  %v149 = vunpack.c.l.b16 %v84
  %v150 = vunpack.c.l.b16 %v85
  %v151 = vunpack.c.l.b16 %v86
  %v152 = vunpack.c.l.b16 %v87
  %v153 = vunpack.c.l.b16 %v88
  %v154 = vunpack.c.l.b16 %v89
  %v155 = vunpack.c.l.b16 %v90
  %v156 = vunpack.c.l.b16 %v91
  %v157 = vunpack.c.l.b16 %v92
  %v158 = vunpack.c.l.b16 %v93
  %v159 = vunpack.c.l.b16 %v94
  %v160 = vunpack.c.l.b16 %v95
  %v161 = vunpack.c.l.b16 %v96
  %v162 = vunpack.c.l.b16 %v97
  %v163 = vunpack.c.l.b16 %v98
  %v164 = vunpack.c.l.b16 %v99
  %v165 = vunpack.c.l.b16 %v100
  %v166 = vunpack.c.l.b16 %v101
  %v167 = vunpack.c.l.b16 %v102
  %v168 = vunpack.c.l.b16 %v103
  %v169 = vunpack.c.l.b16 %v104
  %v170 = vunpack.c.l.b16 %v105
  %v171 = vunpack.c.l.b16 %v106
  %v172 = vunpack.c.l.b16 %v107
  %v173 = vunpack.c.l.b16 %v108
  %v174 = vunpack.c.l.b16 %v109
  %v175 = vunpack.c.l.b16 %v110
  %v176 = vunpack.c.l.b16 %v111
  %v177 = vunpack.c.l.b16 %v112
  %v178 = vunpack.c.l.b16 %v113
  %v179 = vunpack.c.l.b16 %v114
  %v180 = vunpack.c.l.b16 %v115
  %v181 = vpack.c.b16 %v150, %v149
  %v182 = vpack.c.b16 %v152, %v151
  %v183 = vpack.c.b16 %v154, %v153
  %v184 = vpack.c.b16 %v156, %v155
  %v185 = vpack.c.b16 %v158, %v157
  %v186 = vpack.c.b16 %v160, %v159
  %v187 = vpack.c.b16 %v162, %v161
  %v188 = vpack.c.b16 %v164, %v163
  %v189 = vpack.c.b16 %v166, %v165
  %v190 = vpack.c.b16 %v168, %v167
  %v191 = vpack.c.b16 %v170, %v169
  %v192 = vpack.c.b16 %v172, %v171
  %v193 = vpack.c.b16 %v174, %v173
  %v194 = vpack.c.b16 %v176, %v175
  %v195 = vpack.c.b16 %v178, %v177
  %v196 = vpack.c.b16 %v180, %v179
  %vm197 = vcmask 23552
  %v199 = vsel %vm197, %v181, 0
  %v202 = vsel %vm197, %v182, 0
  %v205 = vsel %vm197, %v183, 0
  %v208 = vsel %vm197, %v184, 0
  %v211 = vsel %vm197, %v185, 0
  %v214 = vsel %vm197, %v186, 0
  %v217 = vsel %vm197, %v187, 0
  %v220 = vsel %vm197, %v188, 0
  %v223 = vsel %vm197, %v189, 0
  %v226 = vsel %vm197, %v190, 0
  %v229 = vsel %vm197, %v191, 0
  %v232 = vsel %vm197, %v192, 0
  %v235 = vsel %vm197, %v193, 0
  %v238 = vsel %vm197, %v194, 0
  %v241 = vsel %vm197, %v195, 0
  %v244 = vsel %vm197, %v196, 0
  %vm246 = vcmask 1040384
  %vm247 = vcmask 1041408
  %v248 = vsel %vm246, 4294967295, 65535
  %v249 = vsel %vm247, %v248, 0
  %v251 = vand.u32 %v116, %v249
  %253 = vmatpush.bf16.msra.mxu0 0
  %254 = vmatpush.bf16.msra.mxu0 0
  %255 = vmatpush.bf16.msra.mxu0 0
  %256 = vmatpush.bf16.msra.mxu0 0
  %257 = vmatpush.bf16.msra.mxu0 0
  %258 = vmatpush.bf16.msra.mxu0 0
  %259 = vmatpush.bf16.msra.mxu0 0
  %260 = vmatpush.bf16.msra.mxu0 %v251
  %261 = vmatmul.bf16.gmra.mxu0 %v199
  %v262 = vpop.f32.mrf.mxu0
  %v263 = vadd.f32 0.0, %v262
  %v264 = vpop.f32.mrf.mxu0
  %v265 = vadd.f32 0.0, %v264
  %266 = vmatmul.bf16.gmra.mxu0 %v202
  %v267 = vpop.f32.mrf.mxu0
  %v268 = vadd.f32 0.0, %v267
  %v269 = vpop.f32.mrf.mxu0
  %v270 = vadd.f32 0.0, %v269
  %271 = vmatmul.bf16.gmra.mxu0 %v205
  %v272 = vpop.f32.mrf.mxu0
  %v273 = vadd.f32 0.0, %v272
  %v274 = vpop.f32.mrf.mxu0
  %v275 = vadd.f32 0.0, %v274
  %276 = vmatmul.bf16.gmra.mxu0 %v208
  %v277 = vpop.f32.mrf.mxu0
  %v278 = vadd.f32 0.0, %v277
  %v279 = vpop.f32.mrf.mxu0
  %v280 = vadd.f32 0.0, %v279
  %281 = vmatmul.bf16.gmra.mxu0 %v211
  %v282 = vpop.f32.mrf.mxu0
  %v283 = vadd.f32 0.0, %v282
  %v284 = vpop.f32.mrf.mxu0
  %v285 = vadd.f32 0.0, %v284
  %286 = vmatmul.bf16.gmra.mxu0 %v214
  %v287 = vpop.f32.mrf.mxu0
  %v288 = vadd.f32 0.0, %v287
  %v289 = vpop.f32.mrf.mxu0
  %v290 = vadd.f32 0.0, %v289
  %291 = vmatmul.bf16.gmra.mxu0 %v217
  %v292 = vpop.f32.mrf.mxu0
  %v293 = vadd.f32 0.0, %v292
  %v294 = vpop.f32.mrf.mxu0
  %v295 = vadd.f32 0.0, %v294
  %296 = vmatmul.bf16.gmra.mxu0 %v220
  %v297 = vpop.f32.mrf.mxu0
  %v298 = vadd.f32 0.0, %v297
  %v299 = vpop.f32.mrf.mxu0
  %v300 = vadd.f32 0.0, %v299
  %301 = vmatmul.bf16.gmra.mxu0 %v223
  %v302 = vpop.f32.mrf.mxu0
  %v303 = vadd.f32 0.0, %v302
  %v304 = vpop.f32.mrf.mxu0
  %v305 = vadd.f32 0.0, %v304
  %306 = vmatmul.bf16.gmra.mxu0 %v226
  %v307 = vpop.f32.mrf.mxu0
  %v308 = vadd.f32 0.0, %v307
  %v309 = vpop.f32.mrf.mxu0
  %v310 = vadd.f32 0.0, %v309
  %311 = vmatmul.bf16.gmra.mxu0 %v229
  %v312 = vpop.f32.mrf.mxu0
  %v313 = vadd.f32 0.0, %v312
  %v314 = vpop.f32.mrf.mxu0
  %v315 = vadd.f32 0.0, %v314
  %316 = vmatmul.bf16.gmra.mxu0 %v232
  %v317 = vpop.f32.mrf.mxu0
  %v318 = vadd.f32 0.0, %v317
  %v319 = vpop.f32.mrf.mxu0
  %v320 = vadd.f32 0.0, %v319
  %321 = vmatmul.bf16.gmra.mxu0 %v235
  %v322 = vpop.f32.mrf.mxu0
  %v323 = vadd.f32 0.0, %v322
  %v324 = vpop.f32.mrf.mxu0
  %v325 = vadd.f32 0.0, %v324
  %326 = vmatmul.bf16.gmra.mxu0 %v238
  %v327 = vpop.f32.mrf.mxu0
  %v328 = vadd.f32 0.0, %v327
  %v329 = vpop.f32.mrf.mxu0
  %v330 = vadd.f32 0.0, %v329
  %331 = vmatmul.bf16.gmra.mxu0 %v241
  %v332 = vpop.f32.mrf.mxu0
  %v333 = vadd.f32 0.0, %v332
  %v334 = vpop.f32.mrf.mxu0
  %v335 = vadd.f32 0.0, %v334
  %336 = vmatmul.bf16.gmra.mxu0 %v244
  %v337 = vpop.f32.mrf.mxu0
  %v338 = vadd.f32 0.0, %v337
  %v339 = vpop.f32.mrf.mxu0
  %v340 = vadd.f32 0.0, %v339
  %341 = vdwg.mxu0
  %v374 = vunpack.c.l.b16 %v51
  %v375 = vunpack.c.l.b16 %v52
  %v376 = vunpack.c.l.b16 %v53
  %v377 = vunpack.c.l.b16 %v54
  %v378 = vunpack.c.l.b16 %v55
  %v379 = vunpack.c.l.b16 %v56
  %v380 = vunpack.c.l.b16 %v57
  %v381 = vunpack.c.l.b16 %v58
  %v382 = vunpack.c.l.b16 %v59
  %v383 = vunpack.c.l.b16 %v60
  %v384 = vunpack.c.l.b16 %v61
  %v385 = vunpack.c.l.b16 %v62
  %v386 = vunpack.c.l.b16 %v63
  %v387 = vunpack.c.l.b16 %v64
  %v388 = vunpack.c.l.b16 %v65
  %v389 = vunpack.c.l.b16 %v66
  %v390 = vunpack.c.l.b16 %v67
  %v391 = vunpack.c.l.b16 %v68
  %v392 = vunpack.c.l.b16 %v69
  %v393 = vunpack.c.l.b16 %v70
  %v394 = vunpack.c.l.b16 %v71
  %v395 = vunpack.c.l.b16 %v72
  %v396 = vunpack.c.l.b16 %v73
  %v397 = vunpack.c.l.b16 %v74
  %v398 = vunpack.c.l.b16 %v75
  %v399 = vunpack.c.l.b16 %v76
  %v400 = vunpack.c.l.b16 %v77
  %v401 = vunpack.c.l.b16 %v78
  %v402 = vunpack.c.l.b16 %v79
  %v403 = vunpack.c.l.b16 %v80
  %v404 = vunpack.c.l.b16 %v81
  %v405 = vunpack.c.l.b16 %v82
  %v406 = vpack.c.b16 %v375, %v374
  %v407 = vpack.c.b16 %v377, %v376
  %v408 = vpack.c.b16 %v379, %v378
  %v409 = vpack.c.b16 %v381, %v380
  %v410 = vpack.c.b16 %v383, %v382
  %v411 = vpack.c.b16 %v385, %v384
  %v412 = vpack.c.b16 %v387, %v386
  %v413 = vpack.c.b16 %v389, %v388
  %v414 = vpack.c.b16 %v391, %v390
  %v415 = vpack.c.b16 %v393, %v392
  %v416 = vpack.c.b16 %v395, %v394
  %v417 = vpack.c.b16 %v397, %v396
  %v418 = vpack.c.b16 %v399, %v398
  %v419 = vpack.c.b16 %v401, %v400
  %v420 = vpack.c.b16 %v403, %v402
  %v421 = vpack.c.b16 %v405, %v404
  %v423 = vsel %vm197, %v406, 0
  %v426 = vsel %vm197, %v407, 0
  %v429 = vsel %vm197, %v408, 0
  %v432 = vsel %vm197, %v409, 0
  %v435 = vsel %vm197, %v410, 0
  %v438 = vsel %vm197, %v411, 0
  %v441 = vsel %vm197, %v412, 0
  %v444 = vsel %vm197, %v413, 0
  %v447 = vsel %vm197, %v414, 0
  %v450 = vsel %vm197, %v415, 0
  %v453 = vsel %vm197, %v416, 0
  %v456 = vsel %vm197, %v417, 0
  %v459 = vsel %vm197, %v418, 0
  %v462 = vsel %vm197, %v419, 0
  %v465 = vsel %vm197, %v420, 0
  %v468 = vsel %vm197, %v421, 0
  %v471 = vand.u32 %v83, %v249
  %473 = vmatpush.bf16.msra.mxu0 0
  %474 = vmatpush.bf16.msra.mxu0 0
  %475 = vmatpush.bf16.msra.mxu0 0
  %476 = vmatpush.bf16.msra.mxu0 0
  %477 = vmatpush.bf16.msra.mxu0 0
  %478 = vmatpush.bf16.msra.mxu0 0
  %479 = vmatpush.bf16.msra.mxu0 0
  %480 = vmatpush.bf16.msra.mxu0 %v471
  %481 = vmatmul.bf16.gmra.mxu0 %v423
  %v482 = vpop.f32.mrf.mxu0
  %v483 = vadd.f32 %v263, %v482
  %v484 = vpop.f32.mrf.mxu0
  %v485 = vadd.f32 %v265, %v484
  %486 = vmatmul.bf16.gmra.mxu0 %v426
  %v487 = vpop.f32.mrf.mxu0
  %v488 = vadd.f32 %v268, %v487
  %v489 = vpop.f32.mrf.mxu0
  %v490 = vadd.f32 %v270, %v489
  %491 = vmatmul.bf16.gmra.mxu0 %v429
  %v492 = vpop.f32.mrf.mxu0
  %v493 = vadd.f32 %v273, %v492
  %v494 = vpop.f32.mrf.mxu0
  %v495 = vadd.f32 %v275, %v494
  %496 = vmatmul.bf16.gmra.mxu0 %v432
  %v497 = vpop.f32.mrf.mxu0
  %v498 = vadd.f32 %v278, %v497
  %v499 = vpop.f32.mrf.mxu0
  %v500 = vadd.f32 %v280, %v499
  %501 = vmatmul.bf16.gmra.mxu0 %v435
  %v502 = vpop.f32.mrf.mxu0
  %v503 = vadd.f32 %v283, %v502
  %v504 = vpop.f32.mrf.mxu0
  %v505 = vadd.f32 %v285, %v504
  %506 = vmatmul.bf16.gmra.mxu0 %v438
  %v507 = vpop.f32.mrf.mxu0
  %v508 = vadd.f32 %v288, %v507
  %v509 = vpop.f32.mrf.mxu0
  %v510 = vadd.f32 %v290, %v509
  %511 = vmatmul.bf16.gmra.mxu0 %v441
  %v512 = vpop.f32.mrf.mxu0
  %v513 = vadd.f32 %v293, %v512
  %v514 = vpop.f32.mrf.mxu0
  %v515 = vadd.f32 %v295, %v514
  %516 = vmatmul.bf16.gmra.mxu0 %v444
  %v517 = vpop.f32.mrf.mxu0
  %v518 = vadd.f32 %v298, %v517
  %v519 = vpop.f32.mrf.mxu0
  %v520 = vadd.f32 %v300, %v519
  %521 = vmatmul.bf16.gmra.mxu0 %v447
  %v522 = vpop.f32.mrf.mxu0
  %v523 = vadd.f32 %v303, %v522
  %v524 = vpop.f32.mrf.mxu0
  %v525 = vadd.f32 %v305, %v524
  %526 = vmatmul.bf16.gmra.mxu0 %v450
  %v527 = vpop.f32.mrf.mxu0
  %v528 = vadd.f32 %v308, %v527
  %v529 = vpop.f32.mrf.mxu0
  %v530 = vadd.f32 %v310, %v529
  %531 = vmatmul.bf16.gmra.mxu0 %v453
  %v532 = vpop.f32.mrf.mxu0
  %v533 = vadd.f32 %v313, %v532
  %v534 = vpop.f32.mrf.mxu0
  %v535 = vadd.f32 %v315, %v534
  %536 = vmatmul.bf16.gmra.mxu0 %v456
  %v537 = vpop.f32.mrf.mxu0
  %v538 = vadd.f32 %v318, %v537
  %v539 = vpop.f32.mrf.mxu0
  %v540 = vadd.f32 %v320, %v539
  %541 = vmatmul.bf16.gmra.mxu0 %v459
  %v542 = vpop.f32.mrf.mxu0
  %v543 = vadd.f32 %v323, %v542
  %v544 = vpop.f32.mrf.mxu0
  %v545 = vadd.f32 %v325, %v544
  %546 = vmatmul.bf16.gmra.mxu0 %v462
  %v547 = vpop.f32.mrf.mxu0
  %v548 = vadd.f32 %v328, %v547
  %v549 = vpop.f32.mrf.mxu0
  %v550 = vadd.f32 %v330, %v549
  %551 = vmatmul.bf16.gmra.mxu0 %v465
  %v552 = vpop.f32.mrf.mxu0
  %v553 = vadd.f32 %v333, %v552
  %v554 = vpop.f32.mrf.mxu0
  %v555 = vadd.f32 %v335, %v554
  %556 = vmatmul.bf16.gmra.mxu0 %v468
  %v557 = vpop.f32.mrf.mxu0
  %v558 = vadd.f32 %v338, %v557
  %v559 = vpop.f32.mrf.mxu0
  %v560 = vadd.f32 %v340, %v559
  %561 = vdwg.mxu0
  %v562 = vld [vmem:[%s2] sm:$0xf]
  %v563 = vld [vmem:[%s2 + $0x4] sm:$0xf]
  %v564 = vld [vmem:[%s2 + $0x8] sm:$0xf]
  %v565 = vld [vmem:[%s2 + $0xc] sm:$0xf]
  %v566 = vld [vmem:[%s2 + $0x10] sm:$0xf]
  %v567 = vld [vmem:[%s2 + $0x14] sm:$0xf]
  %v568 = vld [vmem:[%s2 + $0x18] sm:$0xf]
  %v569 = vld [vmem:[%s2 + $0x1c] sm:$0xf]
  %v570 = vld [vmem:[%s2 + $0x20] sm:$0xf]
  %v571 = vld [vmem:[%s2 + $0x24] sm:$0xf]
  %v572 = vld [vmem:[%s2 + $0x28] sm:$0xf]
  %v573 = vld [vmem:[%s2 + $0x2c] sm:$0xf]
  %v574 = vld [vmem:[%s2 + $0x30] sm:$0xf]
  %v575 = vld [vmem:[%s2 + $0x34] sm:$0xf]
  %v576 = vld [vmem:[%s2 + $0x38] sm:$0xf]
  %v577 = vld [vmem:[%s2 + $0x3c] sm:$0xf]
  %v578 = vld [vmem:[%s2 + $0x40] sm:$0xf]
  %v579 = vld [vmem:[%s2 + $0x44] sm:$0xf]
  %v580 = vld [vmem:[%s2 + $0x48] sm:$0xf]
  %v581 = vld [vmem:[%s2 + $0x4c] sm:$0xf]
  %v582 = vld [vmem:[%s2 + $0x50] sm:$0xf]
  %v583 = vld [vmem:[%s2 + $0x54] sm:$0xf]
  %v584 = vld [vmem:[%s2 + $0x58] sm:$0xf]
  %v585 = vld [vmem:[%s2 + $0x5c] sm:$0xf]
  %v586 = vld [vmem:[%s2 + $0x60] sm:$0xf]
  %v587 = vld [vmem:[%s2 + $0x64] sm:$0xf]
  %v588 = vld [vmem:[%s2 + $0x68] sm:$0xf]
  %v589 = vld [vmem:[%s2 + $0x6c] sm:$0xf]
  %v590 = vld [vmem:[%s2 + $0x70] sm:$0xf]
  %v591 = vld [vmem:[%s2 + $0x74] sm:$0xf]
  %v592 = vld [vmem:[%s2 + $0x78] sm:$0xf]
  %v593 = vld [vmem:[%s2 + $0x7c] sm:$0xf]
  %v594 = vld [vmem:[%s7] sm:$0x3]
  %v627 = vunpack.c.l.b16 %v562
  %v628 = vunpack.c.l.b16 %v563
  %v629 = vunpack.c.l.b16 %v564
  %v630 = vunpack.c.l.b16 %v565
  %v631 = vunpack.c.l.b16 %v566
  %v632 = vunpack.c.l.b16 %v567
  %v633 = vunpack.c.l.b16 %v568
  %v634 = vunpack.c.l.b16 %v569
  %v635 = vunpack.c.l.b16 %v570
  %v636 = vunpack.c.l.b16 %v571
  %v637 = vunpack.c.l.b16 %v572
  %v638 = vunpack.c.l.b16 %v573
  %v639 = vunpack.c.l.b16 %v574
  %v640 = vunpack.c.l.b16 %v575
  %v641 = vunpack.c.l.b16 %v576
  %v642 = vunpack.c.l.b16 %v577
  %v643 = vunpack.c.l.b16 %v578
  %v644 = vunpack.c.l.b16 %v579
  %v645 = vunpack.c.l.b16 %v580
  %v646 = vunpack.c.l.b16 %v581
  %v647 = vunpack.c.l.b16 %v582
  %v648 = vunpack.c.l.b16 %v583
  %v649 = vunpack.c.l.b16 %v584
  %v650 = vunpack.c.l.b16 %v585
  %v651 = vunpack.c.l.b16 %v586
  %v652 = vunpack.c.l.b16 %v587
  %v653 = vunpack.c.l.b16 %v588
  %v654 = vunpack.c.l.b16 %v589
  %v655 = vunpack.c.l.b16 %v590
  %v656 = vunpack.c.l.b16 %v591
  %v657 = vunpack.c.l.b16 %v592
  %v658 = vunpack.c.l.b16 %v593
  %v659 = vpack.c.b16 %v628, %v627
  %v660 = vpack.c.b16 %v630, %v629
  %v661 = vpack.c.b16 %v632, %v631
  %v662 = vpack.c.b16 %v634, %v633
  %v663 = vpack.c.b16 %v636, %v635
  %v664 = vpack.c.b16 %v638, %v637
  %v665 = vpack.c.b16 %v640, %v639
  %v666 = vpack.c.b16 %v642, %v641
  %v667 = vpack.c.b16 %v644, %v643
  %v668 = vpack.c.b16 %v646, %v645
  %v669 = vpack.c.b16 %v648, %v647
  %v670 = vpack.c.b16 %v650, %v649
  %v671 = vpack.c.b16 %v652, %v651
  %v672 = vpack.c.b16 %v654, %v653
  %v673 = vpack.c.b16 %v656, %v655
  %v674 = vpack.c.b16 %v658, %v657
  %v676 = vsel %vm197, %v659, 0
  %v679 = vsel %vm197, %v660, 0
  %v682 = vsel %vm197, %v661, 0
  %v685 = vsel %vm197, %v662, 0
  %v688 = vsel %vm197, %v663, 0
  %v691 = vsel %vm197, %v664, 0
  %v694 = vsel %vm197, %v665, 0
  %v697 = vsel %vm197, %v666, 0
  %v700 = vsel %vm197, %v667, 0
  %v703 = vsel %vm197, %v668, 0
  %v706 = vsel %vm197, %v669, 0
  %v709 = vsel %vm197, %v670, 0
  %v712 = vsel %vm197, %v671, 0
  %v715 = vsel %vm197, %v672, 0
  %v718 = vsel %vm197, %v673, 0
  %v721 = vsel %vm197, %v674, 0
  %v724 = vand.u32 %v594, %v249
  %726 = vmatpush.bf16.msra.mxu0 0
  %727 = vmatpush.bf16.msra.mxu0 0
  %728 = vmatpush.bf16.msra.mxu0 0
  %729 = vmatpush.bf16.msra.mxu0 0
  %730 = vmatpush.bf16.msra.mxu0 0
  %731 = vmatpush.bf16.msra.mxu0 0
  %732 = vmatpush.bf16.msra.mxu0 0
  %733 = vmatpush.bf16.msra.mxu0 %v724
  %734 = vmatmul.bf16.gmra.mxu0 %v676
  %v735 = vpop.f32.mrf.mxu0
  %v736 = vadd.f32 0.0, %v735
  %v737 = vpop.f32.mrf.mxu0
  %v738 = vadd.f32 0.0, %v737
  %739 = vmatmul.bf16.gmra.mxu0 %v679
  %v740 = vpop.f32.mrf.mxu0
  %v741 = vadd.f32 0.0, %v740
  %v742 = vpop.f32.mrf.mxu0
  %v743 = vadd.f32 0.0, %v742
  %744 = vmatmul.bf16.gmra.mxu0 %v682
  %v745 = vpop.f32.mrf.mxu0
  %v746 = vadd.f32 0.0, %v745
  %v747 = vpop.f32.mrf.mxu0
  %v748 = vadd.f32 0.0, %v747
  %749 = vmatmul.bf16.gmra.mxu0 %v685
  %v750 = vpop.f32.mrf.mxu0
  %v751 = vadd.f32 0.0, %v750
  %v752 = vpop.f32.mrf.mxu0
  %v753 = vadd.f32 0.0, %v752
  %754 = vmatmul.bf16.gmra.mxu0 %v688
  %v755 = vpop.f32.mrf.mxu0
  %v756 = vadd.f32 0.0, %v755
  %v757 = vpop.f32.mrf.mxu0
  %v758 = vadd.f32 0.0, %v757
  %759 = vmatmul.bf16.gmra.mxu0 %v691
  %v760 = vpop.f32.mrf.mxu0
  %v761 = vadd.f32 0.0, %v760
  %v762 = vpop.f32.mrf.mxu0
  %v763 = vadd.f32 0.0, %v762
  %764 = vmatmul.bf16.gmra.mxu0 %v694
  %v765 = vpop.f32.mrf.mxu0
  %v766 = vadd.f32 0.0, %v765
  %v767 = vpop.f32.mrf.mxu0
  %v768 = vadd.f32 0.0, %v767
  %769 = vmatmul.bf16.gmra.mxu0 %v697
  %v770 = vpop.f32.mrf.mxu0
  %v771 = vadd.f32 0.0, %v770
  %v772 = vpop.f32.mrf.mxu0
  %v773 = vadd.f32 0.0, %v772
  %774 = vmatmul.bf16.gmra.mxu0 %v700
  %v775 = vpop.f32.mrf.mxu0
  %v776 = vadd.f32 0.0, %v775
  %v777 = vpop.f32.mrf.mxu0
  %v778 = vadd.f32 0.0, %v777
  %779 = vmatmul.bf16.gmra.mxu0 %v703
  %v780 = vpop.f32.mrf.mxu0
  %v781 = vadd.f32 0.0, %v780
  %v782 = vpop.f32.mrf.mxu0
  %v783 = vadd.f32 0.0, %v782
  %784 = vmatmul.bf16.gmra.mxu0 %v706
  %v785 = vpop.f32.mrf.mxu0
  %v786 = vadd.f32 0.0, %v785
  %v787 = vpop.f32.mrf.mxu0
  %v788 = vadd.f32 0.0, %v787
  %789 = vmatmul.bf16.gmra.mxu0 %v709
  %v790 = vpop.f32.mrf.mxu0
  %v791 = vadd.f32 0.0, %v790
  %v792 = vpop.f32.mrf.mxu0
  %v793 = vadd.f32 0.0, %v792
  %794 = vmatmul.bf16.gmra.mxu0 %v712
  %v795 = vpop.f32.mrf.mxu0
  %v796 = vadd.f32 0.0, %v795
  %v797 = vpop.f32.mrf.mxu0
  %v798 = vadd.f32 0.0, %v797
  %799 = vmatmul.bf16.gmra.mxu0 %v715
  %v800 = vpop.f32.mrf.mxu0
  %v801 = vadd.f32 0.0, %v800
  %v802 = vpop.f32.mrf.mxu0
  %v803 = vadd.f32 0.0, %v802
  %804 = vmatmul.bf16.gmra.mxu0 %v718
  %v805 = vpop.f32.mrf.mxu0
  %v806 = vadd.f32 0.0, %v805
  %v807 = vpop.f32.mrf.mxu0
  %v808 = vadd.f32 0.0, %v807
  %809 = vmatmul.bf16.gmra.mxu0 %v721
  %v810 = vpop.f32.mrf.mxu0
  %v811 = vadd.f32 0.0, %v810
  %v812 = vpop.f32.mrf.mxu0
  %v813 = vadd.f32 0.0, %v812
  %814 = vdwg.mxu0
  %v815 = vadd.f32 %v483, %v736
  %v816 = vadd.f32 %v485, %v738
  %v817 = vadd.f32 %v488, %v741
  %v818 = vadd.f32 %v490, %v743
  %v819 = vadd.f32 %v493, %v746
  %v820 = vadd.f32 %v495, %v748
  %v821 = vadd.f32 %v498, %v751
  %v822 = vadd.f32 %v500, %v753
  %v823 = vadd.f32 %v503, %v756
  %v824 = vadd.f32 %v505, %v758
  %v825 = vadd.f32 %v508, %v761
  %v826 = vadd.f32 %v510, %v763
  %v827 = vadd.f32 %v513, %v766
  %v828 = vadd.f32 %v515, %v768
  %v829 = vadd.f32 %v518, %v771
  %v830 = vadd.f32 %v520, %v773
  %v831 = vadd.f32 %v523, %v776
  %v832 = vadd.f32 %v525, %v778
  %v833 = vadd.f32 %v528, %v781
  %v834 = vadd.f32 %v530, %v783
  %v835 = vadd.f32 %v533, %v786
  %v836 = vadd.f32 %v535, %v788
  %v837 = vadd.f32 %v538, %v791
  %v838 = vadd.f32 %v540, %v793
  %v839 = vadd.f32 %v543, %v796
  %v840 = vadd.f32 %v545, %v798
  %v841 = vadd.f32 %v548, %v801
  %v842 = vadd.f32 %v550, %v803
  %v843 = vadd.f32 %v553, %v806
  %v844 = vadd.f32 %v555, %v808
  %v845 = vadd.f32 %v558, %v811
  %v846 = vadd.f32 %v560, %v813
  %v847 = vld [vmem:[%s3] sm:$0xf]
  %v848 = vld [vmem:[%s3 + $0x4] sm:$0xf]
  %v849 = vld [vmem:[%s3 + $0x8] sm:$0xf]
  %v850 = vld [vmem:[%s3 + $0xc] sm:$0xf]
  %v851 = vld [vmem:[%s3 + $0x10] sm:$0xf]
  %v852 = vld [vmem:[%s3 + $0x14] sm:$0xf]
  %v853 = vld [vmem:[%s3 + $0x18] sm:$0xf]
  %v854 = vld [vmem:[%s3 + $0x1c] sm:$0xf]
  %v855 = vld [vmem:[%s3 + $0x20] sm:$0xf]
  %v856 = vld [vmem:[%s3 + $0x24] sm:$0xf]
  %v857 = vld [vmem:[%s3 + $0x28] sm:$0xf]
  %v858 = vld [vmem:[%s3 + $0x2c] sm:$0xf]
  %v859 = vld [vmem:[%s3 + $0x30] sm:$0xf]
  %v860 = vld [vmem:[%s3 + $0x34] sm:$0xf]
  %v861 = vld [vmem:[%s3 + $0x38] sm:$0xf]
  %v862 = vld [vmem:[%s3 + $0x3c] sm:$0xf]
  %v863 = vld [vmem:[%s3 + $0x40] sm:$0xf]
  %v864 = vld [vmem:[%s3 + $0x44] sm:$0xf]
  %v865 = vld [vmem:[%s3 + $0x48] sm:$0xf]
  %v866 = vld [vmem:[%s3 + $0x4c] sm:$0xf]
  %v867 = vld [vmem:[%s3 + $0x50] sm:$0xf]
  %v868 = vld [vmem:[%s3 + $0x54] sm:$0xf]
  %v869 = vld [vmem:[%s3 + $0x58] sm:$0xf]
  %v870 = vld [vmem:[%s3 + $0x5c] sm:$0xf]
  %v871 = vld [vmem:[%s3 + $0x60] sm:$0xf]
  %v872 = vld [vmem:[%s3 + $0x64] sm:$0xf]
  %v873 = vld [vmem:[%s3 + $0x68] sm:$0xf]
  %v874 = vld [vmem:[%s3 + $0x6c] sm:$0xf]
  %v875 = vld [vmem:[%s3 + $0x70] sm:$0xf]
  %v876 = vld [vmem:[%s3 + $0x74] sm:$0xf]
  %v877 = vld [vmem:[%s3 + $0x78] sm:$0xf]
  %v878 = vld [vmem:[%s3 + $0x7c] sm:$0xf]
  %v879 = vld [vmem:[%s8] sm:$0x3]
  %v912 = vunpack.c.l.b16 %v847
  %v913 = vunpack.c.l.b16 %v848
  %v914 = vunpack.c.l.b16 %v849
  %v915 = vunpack.c.l.b16 %v850
  %v916 = vunpack.c.l.b16 %v851
  %v917 = vunpack.c.l.b16 %v852
  %v918 = vunpack.c.l.b16 %v853
  %v919 = vunpack.c.l.b16 %v854
  %v920 = vunpack.c.l.b16 %v855
  %v921 = vunpack.c.l.b16 %v856
  %v922 = vunpack.c.l.b16 %v857
  %v923 = vunpack.c.l.b16 %v858
  %v924 = vunpack.c.l.b16 %v859
  %v925 = vunpack.c.l.b16 %v860
  %v926 = vunpack.c.l.b16 %v861
  %v927 = vunpack.c.l.b16 %v862
  %v928 = vunpack.c.l.b16 %v863
  %v929 = vunpack.c.l.b16 %v864
  %v930 = vunpack.c.l.b16 %v865
  %v931 = vunpack.c.l.b16 %v866
  %v932 = vunpack.c.l.b16 %v867
  %v933 = vunpack.c.l.b16 %v868
  %v934 = vunpack.c.l.b16 %v869
  %v935 = vunpack.c.l.b16 %v870
  %v936 = vunpack.c.l.b16 %v871
  %v937 = vunpack.c.l.b16 %v872
  %v938 = vunpack.c.l.b16 %v873
  %v939 = vunpack.c.l.b16 %v874
  %v940 = vunpack.c.l.b16 %v875
  %v941 = vunpack.c.l.b16 %v876
  %v942 = vunpack.c.l.b16 %v877
  %v943 = vunpack.c.l.b16 %v878
  %v944 = vpack.c.b16 %v913, %v912
  %v945 = vpack.c.b16 %v915, %v914
  %v946 = vpack.c.b16 %v917, %v916
  %v947 = vpack.c.b16 %v919, %v918
  %v948 = vpack.c.b16 %v921, %v920
  %v949 = vpack.c.b16 %v923, %v922
  %v950 = vpack.c.b16 %v925, %v924
  %v951 = vpack.c.b16 %v927, %v926
  %v952 = vpack.c.b16 %v929, %v928
  %v953 = vpack.c.b16 %v931, %v930
  %v954 = vpack.c.b16 %v933, %v932
  %v955 = vpack.c.b16 %v935, %v934
  %v956 = vpack.c.b16 %v937, %v936
  %v957 = vpack.c.b16 %v939, %v938
  %v958 = vpack.c.b16 %v941, %v940
  %v959 = vpack.c.b16 %v943, %v942
  %v961 = vsel %vm197, %v944, 0
  %v964 = vsel %vm197, %v945, 0
  %v967 = vsel %vm197, %v946, 0
  %v970 = vsel %vm197, %v947, 0
  %v973 = vsel %vm197, %v948, 0
  %v976 = vsel %vm197, %v949, 0
  %v979 = vsel %vm197, %v950, 0
  %v982 = vsel %vm197, %v951, 0
  %v985 = vsel %vm197, %v952, 0
  %v988 = vsel %vm197, %v953, 0
  %v991 = vsel %vm197, %v954, 0
  %v994 = vsel %vm197, %v955, 0
  %v997 = vsel %vm197, %v956, 0
  %v1000 = vsel %vm197, %v957, 0
  %v1003 = vsel %vm197, %v958, 0
  %v1006 = vsel %vm197, %v959, 0
  %v1009 = vand.u32 %v879, %v249
  %1011 = vmatpush.bf16.msra.mxu0 0
  %1012 = vmatpush.bf16.msra.mxu0 0
  %1013 = vmatpush.bf16.msra.mxu0 0
  %1014 = vmatpush.bf16.msra.mxu0 0
  %1015 = vmatpush.bf16.msra.mxu0 0
  %1016 = vmatpush.bf16.msra.mxu0 0
  %1017 = vmatpush.bf16.msra.mxu0 0
  %1018 = vmatpush.bf16.msra.mxu0 %v1009
  %1019 = vmatmul.bf16.gmra.mxu0 %v961
  %v1020 = vpop.f32.mrf.mxu0
  %v1021 = vadd.f32 0.0, %v1020
  %v1022 = vpop.f32.mrf.mxu0
  %v1023 = vadd.f32 0.0, %v1022
  %1024 = vmatmul.bf16.gmra.mxu0 %v964
  %v1025 = vpop.f32.mrf.mxu0
  %v1026 = vadd.f32 0.0, %v1025
  %v1027 = vpop.f32.mrf.mxu0
  %v1028 = vadd.f32 0.0, %v1027
  %1029 = vmatmul.bf16.gmra.mxu0 %v967
  %v1030 = vpop.f32.mrf.mxu0
  %v1031 = vadd.f32 0.0, %v1030
  %v1032 = vpop.f32.mrf.mxu0
  %v1033 = vadd.f32 0.0, %v1032
  %1034 = vmatmul.bf16.gmra.mxu0 %v970
  %v1035 = vpop.f32.mrf.mxu0
  %v1036 = vadd.f32 0.0, %v1035
  %v1037 = vpop.f32.mrf.mxu0
  %v1038 = vadd.f32 0.0, %v1037
  %1039 = vmatmul.bf16.gmra.mxu0 %v973
  %v1040 = vpop.f32.mrf.mxu0
  %v1041 = vadd.f32 0.0, %v1040
  %v1042 = vpop.f32.mrf.mxu0
  %v1043 = vadd.f32 0.0, %v1042
  %1044 = vmatmul.bf16.gmra.mxu0 %v976
  %v1045 = vpop.f32.mrf.mxu0
  %v1046 = vadd.f32 0.0, %v1045
  %v1047 = vpop.f32.mrf.mxu0
  %v1048 = vadd.f32 0.0, %v1047
  %1049 = vmatmul.bf16.gmra.mxu0 %v979
  %v1050 = vpop.f32.mrf.mxu0
  %v1051 = vadd.f32 0.0, %v1050
  %v1052 = vpop.f32.mrf.mxu0
  %v1053 = vadd.f32 0.0, %v1052
  %1054 = vmatmul.bf16.gmra.mxu0 %v982
  %v1055 = vpop.f32.mrf.mxu0
  %v1056 = vadd.f32 0.0, %v1055
  %v1057 = vpop.f32.mrf.mxu0
  %v1058 = vadd.f32 0.0, %v1057
  %1059 = vmatmul.bf16.gmra.mxu0 %v985
  %v1060 = vpop.f32.mrf.mxu0
  %v1061 = vadd.f32 0.0, %v1060
  %v1062 = vpop.f32.mrf.mxu0
  %v1063 = vadd.f32 0.0, %v1062
  %1064 = vmatmul.bf16.gmra.mxu0 %v988
  %v1065 = vpop.f32.mrf.mxu0
  %v1066 = vadd.f32 0.0, %v1065
  %v1067 = vpop.f32.mrf.mxu0
  %v1068 = vadd.f32 0.0, %v1067
  %1069 = vmatmul.bf16.gmra.mxu0 %v991
  %v1070 = vpop.f32.mrf.mxu0
  %v1071 = vadd.f32 0.0, %v1070
  %v1072 = vpop.f32.mrf.mxu0
  %v1073 = vadd.f32 0.0, %v1072
  %1074 = vmatmul.bf16.gmra.mxu0 %v994
  %v1075 = vpop.f32.mrf.mxu0
  %v1076 = vadd.f32 0.0, %v1075
  %v1077 = vpop.f32.mrf.mxu0
  %v1078 = vadd.f32 0.0, %v1077
  %1079 = vmatmul.bf16.gmra.mxu0 %v997
  %v1080 = vpop.f32.mrf.mxu0
  %v1081 = vadd.f32 0.0, %v1080
  %v1082 = vpop.f32.mrf.mxu0
  %v1083 = vadd.f32 0.0, %v1082
  %1084 = vmatmul.bf16.gmra.mxu0 %v1000
  %v1085 = vpop.f32.mrf.mxu0
  %v1086 = vadd.f32 0.0, %v1085
  %v1087 = vpop.f32.mrf.mxu0
  %v1088 = vadd.f32 0.0, %v1087
  %1089 = vmatmul.bf16.gmra.mxu0 %v1003
  %v1090 = vpop.f32.mrf.mxu0
  %v1091 = vadd.f32 0.0, %v1090
  %v1092 = vpop.f32.mrf.mxu0
  %v1093 = vadd.f32 0.0, %v1092
  %1094 = vmatmul.bf16.gmra.mxu0 %v1006
  %v1095 = vpop.f32.mrf.mxu0
  %v1096 = vadd.f32 0.0, %v1095
  %v1097 = vpop.f32.mrf.mxu0
  %v1098 = vadd.f32 0.0, %v1097
  %1099 = vdwg.mxu0
  %v1100 = vadd.f32 %v815, %v1021
  %v1101 = vadd.f32 %v816, %v1023
  %v1102 = vadd.f32 %v817, %v1026
  %v1103 = vadd.f32 %v818, %v1028
  %v1104 = vadd.f32 %v819, %v1031
  %v1105 = vadd.f32 %v820, %v1033
  %v1106 = vadd.f32 %v821, %v1036
  %v1107 = vadd.f32 %v822, %v1038
  %v1108 = vadd.f32 %v823, %v1041
  %v1109 = vadd.f32 %v824, %v1043
  %v1110 = vadd.f32 %v825, %v1046
  %v1111 = vadd.f32 %v826, %v1048
  %v1112 = vadd.f32 %v827, %v1051
  %v1113 = vadd.f32 %v828, %v1053
  %v1114 = vadd.f32 %v829, %v1056
  %v1115 = vadd.f32 %v830, %v1058
  %v1116 = vadd.f32 %v831, %v1061
  %v1117 = vadd.f32 %v832, %v1063
  %v1118 = vadd.f32 %v833, %v1066
  %v1119 = vadd.f32 %v834, %v1068
  %v1120 = vadd.f32 %v835, %v1071
  %v1121 = vadd.f32 %v836, %v1073
  %v1122 = vadd.f32 %v837, %v1076
  %v1123 = vadd.f32 %v838, %v1078
  %v1124 = vadd.f32 %v839, %v1081
  %v1125 = vadd.f32 %v840, %v1083
  %v1126 = vadd.f32 %v841, %v1086
  %v1127 = vadd.f32 %v842, %v1088
  %v1128 = vadd.f32 %v843, %v1091
  %v1129 = vadd.f32 %v844, %v1093
  %v1130 = vadd.f32 %v845, %v1096
  %v1131 = vadd.f32 %v846, %v1098
  %v1132 = vld [vmem:[%s4] sm:$0xf]
  %v1133 = vld [vmem:[%s4 + $0x4] sm:$0xf]
  %v1134 = vld [vmem:[%s4 + $0x8] sm:$0xf]
  %v1135 = vld [vmem:[%s4 + $0xc] sm:$0xf]
  %v1136 = vld [vmem:[%s4 + $0x10] sm:$0xf]
  %v1137 = vld [vmem:[%s4 + $0x14] sm:$0xf]
  %v1138 = vld [vmem:[%s4 + $0x18] sm:$0xf]
  %v1139 = vld [vmem:[%s4 + $0x1c] sm:$0xf]
  %v1140 = vld [vmem:[%s4 + $0x20] sm:$0xf]
  %v1141 = vld [vmem:[%s4 + $0x24] sm:$0xf]
  %v1142 = vld [vmem:[%s4 + $0x28] sm:$0xf]
  %v1143 = vld [vmem:[%s4 + $0x2c] sm:$0xf]
  %v1144 = vld [vmem:[%s4 + $0x30] sm:$0xf]
  %v1145 = vld [vmem:[%s4 + $0x34] sm:$0xf]
  %v1146 = vld [vmem:[%s4 + $0x38] sm:$0xf]
  %v1147 = vld [vmem:[%s4 + $0x3c] sm:$0xf]
  %v1148 = vld [vmem:[%s4 + $0x40] sm:$0xf]
  %v1149 = vld [vmem:[%s4 + $0x44] sm:$0xf]
  %v1150 = vld [vmem:[%s4 + $0x48] sm:$0xf]
  %v1151 = vld [vmem:[%s4 + $0x4c] sm:$0xf]
  %v1152 = vld [vmem:[%s4 + $0x50] sm:$0xf]
  %v1153 = vld [vmem:[%s4 + $0x54] sm:$0xf]
  %v1154 = vld [vmem:[%s4 + $0x58] sm:$0xf]
  %v1155 = vld [vmem:[%s4 + $0x5c] sm:$0xf]
  %v1156 = vld [vmem:[%s4 + $0x60] sm:$0xf]
  %v1157 = vld [vmem:[%s4 + $0x64] sm:$0xf]
  %v1158 = vld [vmem:[%s4 + $0x68] sm:$0xf]
  %v1159 = vld [vmem:[%s4 + $0x6c] sm:$0xf]
  %v1160 = vld [vmem:[%s4 + $0x70] sm:$0xf]
  %v1161 = vld [vmem:[%s4 + $0x74] sm:$0xf]
  %v1162 = vld [vmem:[%s4 + $0x78] sm:$0xf]
  %v1163 = vld [vmem:[%s4 + $0x7c] sm:$0xf]
  %v1164 = vld [vmem:[%s9] sm:$0xf]
  %v1165 = vld [vmem:[%s9 + $0x4] sm:$0xf]
  %v1166 = vld [vmem:[%s9 + $0x8] sm:$0xf]
  %v1167 = vld [vmem:[%s9 + $0xc] sm:$0xf]
  %v1200 = vunpack.c.l.b16 %v1132
  %v1201 = vunpack.c.l.b16 %v1133
  %v1202 = vunpack.c.l.b16 %v1134
  %v1203 = vunpack.c.l.b16 %v1135
  %v1204 = vunpack.c.l.b16 %v1136
  %v1205 = vunpack.c.l.b16 %v1137
  %v1206 = vunpack.c.l.b16 %v1138
  %v1207 = vunpack.c.l.b16 %v1139
  %v1208 = vunpack.c.l.b16 %v1140
  %v1209 = vunpack.c.l.b16 %v1141
  %v1210 = vunpack.c.l.b16 %v1142
  %v1211 = vunpack.c.l.b16 %v1143
  %v1212 = vunpack.c.l.b16 %v1144
  %v1213 = vunpack.c.l.b16 %v1145
  %v1214 = vunpack.c.l.b16 %v1146
  %v1215 = vunpack.c.l.b16 %v1147
  %v1216 = vunpack.c.l.b16 %v1148
  %v1217 = vunpack.c.l.b16 %v1149
  %v1218 = vunpack.c.l.b16 %v1150
  %v1219 = vunpack.c.l.b16 %v1151
  %v1220 = vunpack.c.l.b16 %v1152
  %v1221 = vunpack.c.l.b16 %v1153
  %v1222 = vunpack.c.l.b16 %v1154
  %v1223 = vunpack.c.l.b16 %v1155
  %v1224 = vunpack.c.l.b16 %v1156
  %v1225 = vunpack.c.l.b16 %v1157
  %v1226 = vunpack.c.l.b16 %v1158
  %v1227 = vunpack.c.l.b16 %v1159
  %v1228 = vunpack.c.l.b16 %v1160
  %v1229 = vunpack.c.l.b16 %v1161
  %v1230 = vunpack.c.l.b16 %v1162
  %v1231 = vunpack.c.l.b16 %v1163
  %v1232 = vpack.c.b16 %v1201, %v1200
  %v1233 = vpack.c.b16 %v1203, %v1202
  %v1234 = vpack.c.b16 %v1205, %v1204
  %v1235 = vpack.c.b16 %v1207, %v1206
  %v1236 = vpack.c.b16 %v1209, %v1208
  %v1237 = vpack.c.b16 %v1211, %v1210
  %v1238 = vpack.c.b16 %v1213, %v1212
  %v1239 = vpack.c.b16 %v1215, %v1214
  %v1240 = vpack.c.b16 %v1217, %v1216
  %v1241 = vpack.c.b16 %v1219, %v1218
  %v1242 = vpack.c.b16 %v1221, %v1220
  %v1243 = vpack.c.b16 %v1223, %v1222
  %v1244 = vpack.c.b16 %v1225, %v1224
  %v1245 = vpack.c.b16 %v1227, %v1226
  %v1246 = vpack.c.b16 %v1229, %v1228
  %v1247 = vpack.c.b16 %v1231, %v1230
  %v1252 = vunpack.c.l.b16 %v1164
  %v1253 = vunpack.c.l.b16 %v1165
  %v1254 = vunpack.c.l.b16 %v1166
  %v1255 = vunpack.c.l.b16 %v1167
  %v1256 = vpack.c.b16 %v1253, %v1252
  %v1257 = vpack.c.b16 %v1255, %v1254
  %vm1260 = vcmask 261120
  %v1262 = vsel %vm1260, %v1232, 0
  %v1265 = vsel %vm1260, %v1233, 0
  %v1268 = vsel %vm1260, %v1234, 0
  %v1271 = vsel %vm1260, %v1235, 0
  %v1274 = vsel %vm1260, %v1236, 0
  %v1277 = vsel %vm1260, %v1237, 0
  %v1280 = vsel %vm1260, %v1238, 0
  %v1283 = vsel %vm1260, %v1239, 0
  %v1286 = vsel %vm1260, %v1240, 0
  %v1289 = vsel %vm1260, %v1241, 0
  %v1292 = vsel %vm1260, %v1242, 0
  %v1295 = vsel %vm1260, %v1243, 0
  %v1298 = vsel %vm1260, %v1244, 0
  %v1301 = vsel %vm1260, %v1245, 0
  %v1304 = vsel %vm1260, %v1246, 0
  %v1307 = vsel %vm1260, %v1247, 0
  %1309 = vmatpush.bf16.msra.mxu0 0
  %1310 = vmatpush.bf16.msra.mxu0 0
  %1311 = vmatpush.bf16.msra.mxu0 0
  %1312 = vmatpush.bf16.msra.mxu0 0
  %1313 = vmatpush.bf16.msra.mxu0 0
  %1314 = vmatpush.bf16.msra.mxu0 0
  %1315 = vmatpush.bf16.msra.mxu0 %v1257
  %1316 = vmatpush.bf16.msra.mxu0 %v1256
  %1317 = vmatmul.bf16.gmra.mxu0 %v1262
  %v1318 = vpop.f32.mrf.mxu0
  %v1319 = vadd.f32 0.0, %v1318
  %v1320 = vpop.f32.mrf.mxu0
  %v1321 = vadd.f32 0.0, %v1320
  %1322 = vmatmul.bf16.gmra.mxu0 %v1265
  %v1323 = vpop.f32.mrf.mxu0
  %v1324 = vadd.f32 0.0, %v1323
  %v1325 = vpop.f32.mrf.mxu0
  %v1326 = vadd.f32 0.0, %v1325
  %1327 = vmatmul.bf16.gmra.mxu0 %v1268
  %v1328 = vpop.f32.mrf.mxu0
  %v1329 = vadd.f32 0.0, %v1328
  %v1330 = vpop.f32.mrf.mxu0
  %v1331 = vadd.f32 0.0, %v1330
  %1332 = vmatmul.bf16.gmra.mxu0 %v1271
  %v1333 = vpop.f32.mrf.mxu0
  %v1334 = vadd.f32 0.0, %v1333
  %v1335 = vpop.f32.mrf.mxu0
  %v1336 = vadd.f32 0.0, %v1335
  %1337 = vmatmul.bf16.gmra.mxu0 %v1274
  %v1338 = vpop.f32.mrf.mxu0
  %v1339 = vadd.f32 0.0, %v1338
  %v1340 = vpop.f32.mrf.mxu0
  %v1341 = vadd.f32 0.0, %v1340
  %1342 = vmatmul.bf16.gmra.mxu0 %v1277
  %v1343 = vpop.f32.mrf.mxu0
  %v1344 = vadd.f32 0.0, %v1343
  %v1345 = vpop.f32.mrf.mxu0
  %v1346 = vadd.f32 0.0, %v1345
  %1347 = vmatmul.bf16.gmra.mxu0 %v1280
  %v1348 = vpop.f32.mrf.mxu0
  %v1349 = vadd.f32 0.0, %v1348
  %v1350 = vpop.f32.mrf.mxu0
  %v1351 = vadd.f32 0.0, %v1350
  %1352 = vmatmul.bf16.gmra.mxu0 %v1283
  %v1353 = vpop.f32.mrf.mxu0
  %v1354 = vadd.f32 0.0, %v1353
  %v1355 = vpop.f32.mrf.mxu0
  %v1356 = vadd.f32 0.0, %v1355
  %1357 = vmatmul.bf16.gmra.mxu0 %v1286
  %v1358 = vpop.f32.mrf.mxu0
  %v1359 = vadd.f32 0.0, %v1358
  %v1360 = vpop.f32.mrf.mxu0
  %v1361 = vadd.f32 0.0, %v1360
  %1362 = vmatmul.bf16.gmra.mxu0 %v1289
  %v1363 = vpop.f32.mrf.mxu0
  %v1364 = vadd.f32 0.0, %v1363
  %v1365 = vpop.f32.mrf.mxu0
  %v1366 = vadd.f32 0.0, %v1365
  %1367 = vmatmul.bf16.gmra.mxu0 %v1292
  %v1368 = vpop.f32.mrf.mxu0
  %v1369 = vadd.f32 0.0, %v1368
  %v1370 = vpop.f32.mrf.mxu0
  %v1371 = vadd.f32 0.0, %v1370
  %1372 = vmatmul.bf16.gmra.mxu0 %v1295
  %v1373 = vpop.f32.mrf.mxu0
  %v1374 = vadd.f32 0.0, %v1373
  %v1375 = vpop.f32.mrf.mxu0
  %v1376 = vadd.f32 0.0, %v1375
  %1377 = vmatmul.bf16.gmra.mxu0 %v1298
  %v1378 = vpop.f32.mrf.mxu0
  %v1379 = vadd.f32 0.0, %v1378
  %v1380 = vpop.f32.mrf.mxu0
  %v1381 = vadd.f32 0.0, %v1380
  %1382 = vmatmul.bf16.gmra.mxu0 %v1301
  %v1383 = vpop.f32.mrf.mxu0
  %v1384 = vadd.f32 0.0, %v1383
  %v1385 = vpop.f32.mrf.mxu0
  %v1386 = vadd.f32 0.0, %v1385
  %1387 = vmatmul.bf16.gmra.mxu0 %v1304
  %v1388 = vpop.f32.mrf.mxu0
  %v1389 = vadd.f32 0.0, %v1388
  %v1390 = vpop.f32.mrf.mxu0
  %v1391 = vadd.f32 0.0, %v1390
  %1392 = vmatmul.bf16.gmra.mxu0 %v1307
  %v1393 = vpop.f32.mrf.mxu0
  %v1394 = vadd.f32 0.0, %v1393
  %v1395 = vpop.f32.mrf.mxu0
  %v1396 = vadd.f32 0.0, %v1395
  %1397 = vdwg.mxu0
  %v1398 = vadd.f32 %v1100, %v1319
  %v1399 = vadd.f32 %v1101, %v1321
  %v1400 = vadd.f32 %v1102, %v1324
  %v1401 = vadd.f32 %v1103, %v1326
  %v1402 = vadd.f32 %v1104, %v1329
  %v1403 = vadd.f32 %v1105, %v1331
  %v1404 = vadd.f32 %v1106, %v1334
  %v1405 = vadd.f32 %v1107, %v1336
  %v1406 = vadd.f32 %v1108, %v1339
  %v1407 = vadd.f32 %v1109, %v1341
  %v1408 = vadd.f32 %v1110, %v1344
  %v1409 = vadd.f32 %v1111, %v1346
  %v1410 = vadd.f32 %v1112, %v1349
  %v1411 = vadd.f32 %v1113, %v1351
  %v1412 = vadd.f32 %v1114, %v1354
  %v1413 = vadd.f32 %v1115, %v1356
  %v1414 = vadd.f32 %v1116, %v1359
  %v1415 = vadd.f32 %v1117, %v1361
  %v1416 = vadd.f32 %v1118, %v1364
  %v1417 = vadd.f32 %v1119, %v1366
  %v1418 = vadd.f32 %v1120, %v1369
  %v1419 = vadd.f32 %v1121, %v1371
  %v1420 = vadd.f32 %v1122, %v1374
  %v1421 = vadd.f32 %v1123, %v1376
  %v1422 = vadd.f32 %v1124, %v1379
  %v1423 = vadd.f32 %v1125, %v1381
  %v1424 = vadd.f32 %v1126, %v1384
  %v1425 = vadd.f32 %v1127, %v1386
  %v1426 = vadd.f32 %v1128, %v1389
  %v1427 = vadd.f32 %v1129, %v1391
  %v1428 = vadd.f32 %v1130, %v1394
  %v1429 = vadd.f32 %v1131, %v1396
  %v1430 = vld [vmem:[%s10] sm:$0x1]
  %v1432 = vperm.slane %v1430, 0
  %v1434 = vadd.f32 %v1398, %v1432
  %v1435 = vadd.f32 %v1399, %v1432
  %v1436 = vadd.f32 %v1400, %v1432
  %v1437 = vadd.f32 %v1401, %v1432
  %v1438 = vadd.f32 %v1402, %v1432
  %v1439 = vadd.f32 %v1403, %v1432
  %v1440 = vadd.f32 %v1404, %v1432
  %v1441 = vadd.f32 %v1405, %v1432
  %v1442 = vadd.f32 %v1406, %v1432
  %v1443 = vadd.f32 %v1407, %v1432
  %v1444 = vadd.f32 %v1408, %v1432
  %v1445 = vadd.f32 %v1409, %v1432
  %v1446 = vadd.f32 %v1410, %v1432
  %v1447 = vadd.f32 %v1411, %v1432
  %v1448 = vadd.f32 %v1412, %v1432
  %v1449 = vadd.f32 %v1413, %v1432
  %v1450 = vadd.f32 %v1414, %v1432
  %v1451 = vadd.f32 %v1415, %v1432
  %v1452 = vadd.f32 %v1416, %v1432
  %v1453 = vadd.f32 %v1417, %v1432
  %v1454 = vadd.f32 %v1418, %v1432
  %v1455 = vadd.f32 %v1419, %v1432
  %v1456 = vadd.f32 %v1420, %v1432
  %v1457 = vadd.f32 %v1421, %v1432
  %v1458 = vadd.f32 %v1422, %v1432
  %v1459 = vadd.f32 %v1423, %v1432
  %v1460 = vadd.f32 %v1424, %v1432
  %v1461 = vadd.f32 %v1425, %v1432
  %v1462 = vadd.f32 %v1426, %v1432
  %v1463 = vadd.f32 %v1427, %v1432
  %v1464 = vadd.f32 %v1428, %v1432
  %v1465 = vadd.f32 %v1429, %v1432
  %v1466 = vmax.f32 %v1434, 0.0
  %v1467 = vmax.f32 %v1435, 0.0
  %v1468 = vmax.f32 %v1436, 0.0
  %v1469 = vmax.f32 %v1437, 0.0
  %v1470 = vmax.f32 %v1438, 0.0
  %v1471 = vmax.f32 %v1439, 0.0
  %v1472 = vmax.f32 %v1440, 0.0
  %v1473 = vmax.f32 %v1441, 0.0
  %v1474 = vmax.f32 %v1442, 0.0
  %v1475 = vmax.f32 %v1443, 0.0
  %v1476 = vmax.f32 %v1444, 0.0
  %v1477 = vmax.f32 %v1445, 0.0
  %v1478 = vmax.f32 %v1446, 0.0
  %v1479 = vmax.f32 %v1447, 0.0
  %v1480 = vmax.f32 %v1448, 0.0
  %v1481 = vmax.f32 %v1449, 0.0
  %v1482 = vmax.f32 %v1450, 0.0
  %v1483 = vmax.f32 %v1451, 0.0
  %v1484 = vmax.f32 %v1452, 0.0
  %v1485 = vmax.f32 %v1453, 0.0
  %v1486 = vmax.f32 %v1454, 0.0
  %v1487 = vmax.f32 %v1455, 0.0
  %v1488 = vmax.f32 %v1456, 0.0
  %v1489 = vmax.f32 %v1457, 0.0
  %v1490 = vmax.f32 %v1458, 0.0
  %v1491 = vmax.f32 %v1459, 0.0
  %v1492 = vmax.f32 %v1460, 0.0
  %v1493 = vmax.f32 %v1461, 0.0
  %v1494 = vmax.f32 %v1462, 0.0
  %v1495 = vmax.f32 %v1463, 0.0
  %v1496 = vmax.f32 %v1464, 0.0
  %v1497 = vmax.f32 %v1465, 0.0
  %v1498 = vld [vmem:[%s11] sm:$0xf]
  %v1499 = vld [vmem:[%s11 + $0x4] sm:$0xf]
  %v1500 = vld [vmem:[%s11 + $0x8] sm:$0xf]
  %v1501 = vld [vmem:[%s11 + $0xc] sm:$0xf]
  %v1502 = vld [vmem:[%s11 + $0x10] sm:$0xf]
  %v1503 = vld [vmem:[%s11 + $0x14] sm:$0xf]
  %v1504 = vld [vmem:[%s11 + $0x18] sm:$0xf]
  %v1505 = vld [vmem:[%s11 + $0x1c] sm:$0xf]
  %v1506 = vld [vmem:[%s11 + $0x20] sm:$0xf]
  %v1507 = vld [vmem:[%s11 + $0x24] sm:$0xf]
  %v1508 = vld [vmem:[%s11 + $0x28] sm:$0xf]
  %v1509 = vld [vmem:[%s11 + $0x2c] sm:$0xf]
  %v1510 = vld [vmem:[%s11 + $0x30] sm:$0xf]
  %v1511 = vld [vmem:[%s11 + $0x34] sm:$0xf]
  %v1512 = vld [vmem:[%s11 + $0x38] sm:$0xf]
  %v1513 = vld [vmem:[%s11 + $0x3c] sm:$0xf]
  %v1514 = vld [vmem:[%s12] sm:$0x1]
  %v1515 = vpack.c.bf16 %v1467, %v1466
  %v1516 = vpack.c.bf16 %v1469, %v1468
  %v1517 = vpack.c.bf16 %v1471, %v1470
  %v1518 = vpack.c.bf16 %v1473, %v1472
  %v1519 = vpack.c.bf16 %v1475, %v1474
  %v1520 = vpack.c.bf16 %v1477, %v1476
  %v1521 = vpack.c.bf16 %v1479, %v1478
  %v1522 = vpack.c.bf16 %v1481, %v1480
  %v1523 = vpack.c.bf16 %v1483, %v1482
  %v1524 = vpack.c.bf16 %v1485, %v1484
  %v1525 = vpack.c.bf16 %v1487, %v1486
  %v1526 = vpack.c.bf16 %v1489, %v1488
  %v1527 = vpack.c.bf16 %v1491, %v1490
  %v1528 = vpack.c.bf16 %v1493, %v1492
  %v1529 = vpack.c.bf16 %v1495, %v1494
  %v1530 = vpack.c.bf16 %v1497, %v1496
  %v1532 = vperm.slane %v1514, 0
  %v1550 = vunpack.c.l.b16 %v1498
  %v1551 = vunpack.c.l.b16 %v1499
  %v1552 = vunpack.c.l.b16 %v1500
  %v1553 = vunpack.c.l.b16 %v1501
  %v1554 = vunpack.c.l.b16 %v1502
  %v1555 = vunpack.c.l.b16 %v1503
  %v1556 = vunpack.c.l.b16 %v1504
  %v1557 = vunpack.c.l.b16 %v1505
  %v1558 = vunpack.c.l.b16 %v1506
  %v1559 = vunpack.c.l.b16 %v1507
  %v1560 = vunpack.c.l.b16 %v1508
  %v1561 = vunpack.c.l.b16 %v1509
  %v1562 = vunpack.c.l.b16 %v1510
  %v1563 = vunpack.c.l.b16 %v1511
  %v1564 = vunpack.c.l.b16 %v1512
  %v1565 = vunpack.c.l.b16 %v1513
  %v1566 = vpack.c.b16 %v1551, %v1550
  %v1567 = vpack.c.b16 %v1553, %v1552
  %v1568 = vpack.c.b16 %v1555, %v1554
  %v1569 = vpack.c.b16 %v1557, %v1556
  %v1570 = vpack.c.b16 %v1559, %v1558
  %v1571 = vpack.c.b16 %v1561, %v1560
  %v1572 = vpack.c.b16 %v1563, %v1562
  %v1573 = vpack.c.b16 %v1565, %v1564
  %1582 = vmatpush.bf16.msra.mxu0 %v1573
  %1583 = vmatpush.bf16.msra.mxu0 %v1572
  %1584 = vmatpush.bf16.msra.mxu0 %v1571
  %1585 = vmatpush.bf16.msra.mxu0 %v1570
  %1586 = vmatpush.bf16.msra.mxu0 %v1569
  %1587 = vmatpush.bf16.msra.mxu0 %v1568
  %1588 = vmatpush.bf16.msra.mxu0 %v1567
  %1589 = vmatpush.bf16.msra.mxu0 %v1566
  %1590 = vmatmul.bf16.gmra.mxu0 %v1515
  %v1591 = vpop.f32.mrf.mxu0
  %v1592 = vadd.f32 %v1532, %v1591
  %v1593 = vpop.f32.mrf.mxu0
  %v1594 = vadd.f32 %v1532, %v1593
  %1595 = vmatmul.bf16.gmra.mxu0 %v1516
  %v1596 = vpop.f32.mrf.mxu0
  %v1597 = vadd.f32 %v1532, %v1596
  %v1598 = vpop.f32.mrf.mxu0
  %v1599 = vadd.f32 %v1532, %v1598
  %1600 = vmatmul.bf16.gmra.mxu0 %v1517
  %v1601 = vpop.f32.mrf.mxu0
  %v1602 = vadd.f32 %v1532, %v1601
  %v1603 = vpop.f32.mrf.mxu0
  %v1604 = vadd.f32 %v1532, %v1603
  %1605 = vmatmul.bf16.gmra.mxu0 %v1518
  %v1606 = vpop.f32.mrf.mxu0
  %v1607 = vadd.f32 %v1532, %v1606
  %v1608 = vpop.f32.mrf.mxu0
  %v1609 = vadd.f32 %v1532, %v1608
  %1610 = vmatmul.bf16.gmra.mxu0 %v1519
  %v1611 = vpop.f32.mrf.mxu0
  %v1612 = vadd.f32 %v1532, %v1611
  %v1613 = vpop.f32.mrf.mxu0
  %v1614 = vadd.f32 %v1532, %v1613
  %1615 = vmatmul.bf16.gmra.mxu0 %v1520
  %v1616 = vpop.f32.mrf.mxu0
  %v1617 = vadd.f32 %v1532, %v1616
  %v1618 = vpop.f32.mrf.mxu0
  %v1619 = vadd.f32 %v1532, %v1618
  %1620 = vmatmul.bf16.gmra.mxu0 %v1521
  %v1621 = vpop.f32.mrf.mxu0
  %v1622 = vadd.f32 %v1532, %v1621
  %v1623 = vpop.f32.mrf.mxu0
  %v1624 = vadd.f32 %v1532, %v1623
  %1625 = vmatmul.bf16.gmra.mxu0 %v1522
  %v1626 = vpop.f32.mrf.mxu0
  %v1627 = vadd.f32 %v1532, %v1626
  %v1628 = vpop.f32.mrf.mxu0
  %v1629 = vadd.f32 %v1532, %v1628
  %1630 = vmatmul.bf16.gmra.mxu0 %v1523
  %v1631 = vpop.f32.mrf.mxu0
  %v1632 = vadd.f32 %v1532, %v1631
  %v1633 = vpop.f32.mrf.mxu0
  %v1634 = vadd.f32 %v1532, %v1633
  %1635 = vmatmul.bf16.gmra.mxu0 %v1524
  %v1636 = vpop.f32.mrf.mxu0
  %v1637 = vadd.f32 %v1532, %v1636
  %v1638 = vpop.f32.mrf.mxu0
  %v1639 = vadd.f32 %v1532, %v1638
  %1640 = vmatmul.bf16.gmra.mxu0 %v1525
  %v1641 = vpop.f32.mrf.mxu0
  %v1642 = vadd.f32 %v1532, %v1641
  %v1643 = vpop.f32.mrf.mxu0
  %v1644 = vadd.f32 %v1532, %v1643
  %1645 = vmatmul.bf16.gmra.mxu0 %v1526
  %v1646 = vpop.f32.mrf.mxu0
  %v1647 = vadd.f32 %v1532, %v1646
  %v1648 = vpop.f32.mrf.mxu0
  %v1649 = vadd.f32 %v1532, %v1648
  %1650 = vmatmul.bf16.gmra.mxu0 %v1527
  %v1651 = vpop.f32.mrf.mxu0
  %v1652 = vadd.f32 %v1532, %v1651
  %v1653 = vpop.f32.mrf.mxu0
  %v1654 = vadd.f32 %v1532, %v1653
  %1655 = vmatmul.bf16.gmra.mxu0 %v1528
  %v1656 = vpop.f32.mrf.mxu0
  %v1657 = vadd.f32 %v1532, %v1656
  %v1658 = vpop.f32.mrf.mxu0
  %v1659 = vadd.f32 %v1532, %v1658
  %1660 = vmatmul.bf16.gmra.mxu0 %v1529
  %v1661 = vpop.f32.mrf.mxu0
  %v1662 = vadd.f32 %v1532, %v1661
  %v1663 = vpop.f32.mrf.mxu0
  %v1664 = vadd.f32 %v1532, %v1663
  %1665 = vmatmul.bf16.gmra.mxu0 %v1530
  %v1666 = vpop.f32.mrf.mxu0
  %v1667 = vadd.f32 %v1532, %v1666
  %v1668 = vpop.f32.mrf.mxu0
  %v1669 = vadd.f32 %v1532, %v1668
  %1670 = vdwg.mxu0
  %v1671 = vmax.f32 %v1592, 0.0
  %v1672 = vmax.f32 %v1594, 0.0
  %v1673 = vmax.f32 %v1597, 0.0
  %v1674 = vmax.f32 %v1599, 0.0
  %v1675 = vmax.f32 %v1602, 0.0
  %v1676 = vmax.f32 %v1604, 0.0
  %v1677 = vmax.f32 %v1607, 0.0
  %v1678 = vmax.f32 %v1609, 0.0
  %v1679 = vmax.f32 %v1612, 0.0
  %v1680 = vmax.f32 %v1614, 0.0
  %v1681 = vmax.f32 %v1617, 0.0
  %v1682 = vmax.f32 %v1619, 0.0
  %v1683 = vmax.f32 %v1622, 0.0
  %v1684 = vmax.f32 %v1624, 0.0
  %v1685 = vmax.f32 %v1627, 0.0
  %v1686 = vmax.f32 %v1629, 0.0
  %v1687 = vmax.f32 %v1632, 0.0
  %v1688 = vmax.f32 %v1634, 0.0
  %v1689 = vmax.f32 %v1637, 0.0
  %v1690 = vmax.f32 %v1639, 0.0
  %v1691 = vmax.f32 %v1642, 0.0
  %v1692 = vmax.f32 %v1644, 0.0
  %v1693 = vmax.f32 %v1647, 0.0
  %v1694 = vmax.f32 %v1649, 0.0
  %v1695 = vmax.f32 %v1652, 0.0
  %v1696 = vmax.f32 %v1654, 0.0
  %v1697 = vmax.f32 %v1657, 0.0
  %v1698 = vmax.f32 %v1659, 0.0
  %v1699 = vmax.f32 %v1662, 0.0
  %v1700 = vmax.f32 %v1664, 0.0
  %v1701 = vmax.f32 %v1667, 0.0
  %v1702 = vmax.f32 %v1669, 0.0
  %v1703 = vld [vmem:[%s13] sm:$0xf]
  %v1704 = vld [vmem:[%s13 + $0x4] sm:$0xf]
  %v1705 = vld [vmem:[%s13 + $0x8] sm:$0xf]
  %v1706 = vld [vmem:[%s13 + $0xc] sm:$0xf]
  %v1707 = vld [vmem:[%s13 + $0x10] sm:$0xf]
  %v1708 = vld [vmem:[%s13 + $0x14] sm:$0xf]
  %v1709 = vld [vmem:[%s13 + $0x18] sm:$0xf]
  %v1710 = vld [vmem:[%s13 + $0x1c] sm:$0xf]
  %v1711 = vld [vmem:[%s13 + $0x20] sm:$0xf]
  %v1712 = vld [vmem:[%s13 + $0x24] sm:$0xf]
  %v1713 = vld [vmem:[%s13 + $0x28] sm:$0xf]
  %v1714 = vld [vmem:[%s13 + $0x2c] sm:$0xf]
  %v1715 = vld [vmem:[%s13 + $0x30] sm:$0xf]
  %v1716 = vld [vmem:[%s13 + $0x34] sm:$0xf]
  %v1717 = vld [vmem:[%s13 + $0x38] sm:$0xf]
  %v1718 = vld [vmem:[%s13 + $0x3c] sm:$0xf]
  %v1719 = vld [vmem:[%s14] sm:$0x1]
  %v1720 = vpack.c.bf16 %v1672, %v1671
  %v1721 = vpack.c.bf16 %v1674, %v1673
  %v1722 = vpack.c.bf16 %v1676, %v1675
  %v1723 = vpack.c.bf16 %v1678, %v1677
  %v1724 = vpack.c.bf16 %v1680, %v1679
  %v1725 = vpack.c.bf16 %v1682, %v1681
  %v1726 = vpack.c.bf16 %v1684, %v1683
  %v1727 = vpack.c.bf16 %v1686, %v1685
  %v1728 = vpack.c.bf16 %v1688, %v1687
  %v1729 = vpack.c.bf16 %v1690, %v1689
  %v1730 = vpack.c.bf16 %v1692, %v1691
  %v1731 = vpack.c.bf16 %v1694, %v1693
  %v1732 = vpack.c.bf16 %v1696, %v1695
  %v1733 = vpack.c.bf16 %v1698, %v1697
  %v1734 = vpack.c.bf16 %v1700, %v1699
  %v1735 = vpack.c.bf16 %v1702, %v1701
  %v1737 = vperm.slane %v1719, 0
  %v1755 = vunpack.c.l.b16 %v1703
  %v1756 = vunpack.c.l.b16 %v1704
  %v1757 = vunpack.c.l.b16 %v1705
  %v1758 = vunpack.c.l.b16 %v1706
  %v1759 = vunpack.c.l.b16 %v1707
  %v1760 = vunpack.c.l.b16 %v1708
  %v1761 = vunpack.c.l.b16 %v1709
  %v1762 = vunpack.c.l.b16 %v1710
  %v1763 = vunpack.c.l.b16 %v1711
  %v1764 = vunpack.c.l.b16 %v1712
  %v1765 = vunpack.c.l.b16 %v1713
  %v1766 = vunpack.c.l.b16 %v1714
  %v1767 = vunpack.c.l.b16 %v1715
  %v1768 = vunpack.c.l.b16 %v1716
  %v1769 = vunpack.c.l.b16 %v1717
  %v1770 = vunpack.c.l.b16 %v1718
  %v1771 = vpack.c.b16 %v1756, %v1755
  %v1772 = vpack.c.b16 %v1758, %v1757
  %v1773 = vpack.c.b16 %v1760, %v1759
  %v1774 = vpack.c.b16 %v1762, %v1761
  %v1775 = vpack.c.b16 %v1764, %v1763
  %v1776 = vpack.c.b16 %v1766, %v1765
  %v1777 = vpack.c.b16 %v1768, %v1767
  %v1778 = vpack.c.b16 %v1770, %v1769
  %1787 = vmatpush.bf16.msra.mxu0 %v1778
  %1788 = vmatpush.bf16.msra.mxu0 %v1777
  %1789 = vmatpush.bf16.msra.mxu0 %v1776
  %1790 = vmatpush.bf16.msra.mxu0 %v1775
  %1791 = vmatpush.bf16.msra.mxu0 %v1774
  %1792 = vmatpush.bf16.msra.mxu0 %v1773
  %1793 = vmatpush.bf16.msra.mxu0 %v1772
  %1794 = vmatpush.bf16.msra.mxu0 %v1771
  %1795 = vmatmul.bf16.gmra.mxu0 %v1720
  %v1796 = vpop.f32.mrf.mxu0
  %v1797 = vadd.f32 %v1737, %v1796
  %v1798 = vpop.f32.mrf.mxu0
  %v1799 = vadd.f32 %v1737, %v1798
  %1800 = vmatmul.bf16.gmra.mxu0 %v1721
  %v1801 = vpop.f32.mrf.mxu0
  %v1802 = vadd.f32 %v1737, %v1801
  %v1803 = vpop.f32.mrf.mxu0
  %v1804 = vadd.f32 %v1737, %v1803
  %1805 = vmatmul.bf16.gmra.mxu0 %v1722
  %v1806 = vpop.f32.mrf.mxu0
  %v1807 = vadd.f32 %v1737, %v1806
  %v1808 = vpop.f32.mrf.mxu0
  %v1809 = vadd.f32 %v1737, %v1808
  %1810 = vmatmul.bf16.gmra.mxu0 %v1723
  %v1811 = vpop.f32.mrf.mxu0
  %v1812 = vadd.f32 %v1737, %v1811
  %v1813 = vpop.f32.mrf.mxu0
  %v1814 = vadd.f32 %v1737, %v1813
  %1815 = vmatmul.bf16.gmra.mxu0 %v1724
  %v1816 = vpop.f32.mrf.mxu0
  %v1817 = vadd.f32 %v1737, %v1816
  %v1818 = vpop.f32.mrf.mxu0
  %v1819 = vadd.f32 %v1737, %v1818
  %1820 = vmatmul.bf16.gmra.mxu0 %v1725
  %v1821 = vpop.f32.mrf.mxu0
  %v1822 = vadd.f32 %v1737, %v1821
  %v1823 = vpop.f32.mrf.mxu0
  %v1824 = vadd.f32 %v1737, %v1823
  %1825 = vmatmul.bf16.gmra.mxu0 %v1726
  %v1826 = vpop.f32.mrf.mxu0
  %v1827 = vadd.f32 %v1737, %v1826
  %v1828 = vpop.f32.mrf.mxu0
  %v1829 = vadd.f32 %v1737, %v1828
  %1830 = vmatmul.bf16.gmra.mxu0 %v1727
  %v1831 = vpop.f32.mrf.mxu0
  %v1832 = vadd.f32 %v1737, %v1831
  %v1833 = vpop.f32.mrf.mxu0
  %v1834 = vadd.f32 %v1737, %v1833
  %1835 = vmatmul.bf16.gmra.mxu0 %v1728
  %v1836 = vpop.f32.mrf.mxu0
  %v1837 = vadd.f32 %v1737, %v1836
  %v1838 = vpop.f32.mrf.mxu0
  %v1839 = vadd.f32 %v1737, %v1838
  %1840 = vmatmul.bf16.gmra.mxu0 %v1729
  %v1841 = vpop.f32.mrf.mxu0
  %v1842 = vadd.f32 %v1737, %v1841
  %v1843 = vpop.f32.mrf.mxu0
  %v1844 = vadd.f32 %v1737, %v1843
  %1845 = vmatmul.bf16.gmra.mxu0 %v1730
  %v1846 = vpop.f32.mrf.mxu0
  %v1847 = vadd.f32 %v1737, %v1846
  %v1848 = vpop.f32.mrf.mxu0
  %v1849 = vadd.f32 %v1737, %v1848
  %1850 = vmatmul.bf16.gmra.mxu0 %v1731
  %v1851 = vpop.f32.mrf.mxu0
  %v1852 = vadd.f32 %v1737, %v1851
  %v1853 = vpop.f32.mrf.mxu0
  %v1854 = vadd.f32 %v1737, %v1853
  %1855 = vmatmul.bf16.gmra.mxu0 %v1732
  %v1856 = vpop.f32.mrf.mxu0
  %v1857 = vadd.f32 %v1737, %v1856
  %v1858 = vpop.f32.mrf.mxu0
  %v1859 = vadd.f32 %v1737, %v1858
  %1860 = vmatmul.bf16.gmra.mxu0 %v1733
  %v1861 = vpop.f32.mrf.mxu0
  %v1862 = vadd.f32 %v1737, %v1861
  %v1863 = vpop.f32.mrf.mxu0
  %v1864 = vadd.f32 %v1737, %v1863
  %1865 = vmatmul.bf16.gmra.mxu0 %v1734
  %v1866 = vpop.f32.mrf.mxu0
  %v1867 = vadd.f32 %v1737, %v1866
  %v1868 = vpop.f32.mrf.mxu0
  %v1869 = vadd.f32 %v1737, %v1868
  %1870 = vmatmul.bf16.gmra.mxu0 %v1735
  %v1871 = vpop.f32.mrf.mxu0
  %v1872 = vadd.f32 %v1737, %v1871
  %v1873 = vpop.f32.mrf.mxu0
  %v1874 = vadd.f32 %v1737, %v1873
  %1875 = vdwg.mxu0
  %v1876 = vxor.u32 %v1797, 2147483648
  %v1877 = vxor.u32 %v1799, 2147483648
  %v1878 = vxor.u32 %v1802, 2147483648
  %v1879 = vxor.u32 %v1804, 2147483648
  %v1880 = vxor.u32 %v1807, 2147483648
  %v1881 = vxor.u32 %v1809, 2147483648
  %v1882 = vxor.u32 %v1812, 2147483648
  %v1883 = vxor.u32 %v1814, 2147483648
  %v1884 = vxor.u32 %v1817, 2147483648
  %v1885 = vxor.u32 %v1819, 2147483648
  %v1886 = vxor.u32 %v1822, 2147483648
  %v1887 = vxor.u32 %v1824, 2147483648
  %v1888 = vxor.u32 %v1827, 2147483648
  %v1889 = vxor.u32 %v1829, 2147483648
  %v1890 = vxor.u32 %v1832, 2147483648
  %v1891 = vxor.u32 %v1834, 2147483648
  %v1892 = vxor.u32 %v1837, 2147483648
  %v1893 = vxor.u32 %v1839, 2147483648
  %v1894 = vxor.u32 %v1842, 2147483648
  %v1895 = vxor.u32 %v1844, 2147483648
  %v1896 = vxor.u32 %v1847, 2147483648
  %v1897 = vxor.u32 %v1849, 2147483648
  %v1898 = vxor.u32 %v1852, 2147483648
  %v1899 = vxor.u32 %v1854, 2147483648
  %v1900 = vxor.u32 %v1857, 2147483648
  %v1901 = vxor.u32 %v1859, 2147483648
  %v1902 = vxor.u32 %v1862, 2147483648
  %v1903 = vxor.u32 %v1864, 2147483648
  %v1904 = vxor.u32 %v1867, 2147483648
  %v1905 = vxor.u32 %v1869, 2147483648
  %v1906 = vxor.u32 %v1872, 2147483648
  %v1907 = vxor.u32 %v1874, 2147483648
  %v1908 = vmul.f32 %v1876, 1.442695
  %v1909 = vpow.pop %v1908
  %v1910 = vmul.f32 %v1877, 1.442695
  %v1911 = vpow.pop %v1910
  %v1912 = vmul.f32 %v1878, 1.442695
  %v1913 = vpow.pop %v1912
  %v1914 = vmul.f32 %v1879, 1.442695
  %v1915 = vpow.pop %v1914
  %v1916 = vmul.f32 %v1880, 1.442695
  %v1917 = vpow.pop %v1916
  %v1918 = vmul.f32 %v1881, 1.442695
  %v1919 = vpow.pop %v1918
  %v1920 = vmul.f32 %v1882, 1.442695
  %v1921 = vpow.pop %v1920
  %v1922 = vmul.f32 %v1883, 1.442695
  %v1923 = vpow.pop %v1922
  %v1924 = vmul.f32 %v1884, 1.442695
  %v1925 = vpow.pop %v1924
  %v1926 = vmul.f32 %v1885, 1.442695
  %v1927 = vpow.pop %v1926
  %v1928 = vmul.f32 %v1886, 1.442695
  %v1929 = vpow.pop %v1928
  %v1930 = vmul.f32 %v1887, 1.442695
  %v1931 = vpow.pop %v1930
  %v1932 = vmul.f32 %v1888, 1.442695
  %v1933 = vpow.pop %v1932
  %v1934 = vmul.f32 %v1889, 1.442695
  %v1935 = vpow.pop %v1934
  %v1936 = vmul.f32 %v1890, 1.442695
  %v1937 = vpow.pop %v1936
  %v1938 = vmul.f32 %v1891, 1.442695
  %v1939 = vpow.pop %v1938
  %v1940 = vmul.f32 %v1892, 1.442695
  %v1941 = vpow.pop %v1940
  %v1942 = vmul.f32 %v1893, 1.442695
  %v1943 = vpow.pop %v1942
  %v1944 = vmul.f32 %v1894, 1.442695
  %v1945 = vpow.pop %v1944
  %v1946 = vmul.f32 %v1895, 1.442695
  %v1947 = vpow.pop %v1946
  %v1948 = vmul.f32 %v1896, 1.442695
  %v1949 = vpow.pop %v1948
  %v1950 = vmul.f32 %v1897, 1.442695
  %v1951 = vpow.pop %v1950
  %v1952 = vmul.f32 %v1898, 1.442695
  %v1953 = vpow.pop %v1952
  %v1954 = vmul.f32 %v1899, 1.442695
  %v1955 = vpow.pop %v1954
  %v1956 = vmul.f32 %v1900, 1.442695
  %v1957 = vpow.pop %v1956
  %v1958 = vmul.f32 %v1901, 1.442695
  %v1959 = vpow.pop %v1958
  %v1960 = vmul.f32 %v1902, 1.442695
  %v1961 = vpow.pop %v1960
  %v1962 = vmul.f32 %v1903, 1.442695
  %v1963 = vpow.pop %v1962
  %v1964 = vmul.f32 %v1904, 1.442695
  %v1965 = vpow.pop %v1964
  %v1966 = vmul.f32 %v1905, 1.442695
  %v1967 = vpow.pop %v1966
  %v1968 = vmul.f32 %v1906, 1.442695
  %v1969 = vpow.pop %v1968
  %v1970 = vmul.f32 %v1907, 1.442695
  %v1971 = vpow.pop %v1970
  %v1972 = vadd.f32 %v1909, 1.0
  %v1973 = vadd.f32 %v1911, 1.0
  %v1974 = vadd.f32 %v1913, 1.0
  %v1975 = vadd.f32 %v1915, 1.0
  %v1976 = vadd.f32 %v1917, 1.0
  %v1977 = vadd.f32 %v1919, 1.0
  %v1978 = vadd.f32 %v1921, 1.0
  %v1979 = vadd.f32 %v1923, 1.0
  %v1980 = vadd.f32 %v1925, 1.0
  %v1981 = vadd.f32 %v1927, 1.0
  %v1982 = vadd.f32 %v1929, 1.0
  %v1983 = vadd.f32 %v1931, 1.0
  %v1984 = vadd.f32 %v1933, 1.0
  %v1985 = vadd.f32 %v1935, 1.0
  %v1986 = vadd.f32 %v1937, 1.0
  %v1987 = vadd.f32 %v1939, 1.0
  %v1988 = vadd.f32 %v1941, 1.0
  %v1989 = vadd.f32 %v1943, 1.0
  %v1990 = vadd.f32 %v1945, 1.0
  %v1991 = vadd.f32 %v1947, 1.0
  %v1992 = vadd.f32 %v1949, 1.0
  %v1993 = vadd.f32 %v1951, 1.0
  %v1994 = vadd.f32 %v1953, 1.0
  %v1995 = vadd.f32 %v1955, 1.0
  %v1996 = vadd.f32 %v1957, 1.0
  %v1997 = vadd.f32 %v1959, 1.0
  %v1998 = vadd.f32 %v1961, 1.0
  %v1999 = vadd.f32 %v1963, 1.0
  %v2000 = vadd.f32 %v1965, 1.0
  %v2001 = vadd.f32 %v1967, 1.0
  %v2002 = vadd.f32 %v1969, 1.0
  %v2003 = vadd.f32 %v1971, 1.0
  %v2004 = vrcp.pop %v1972
  %v2005 = vmul.f32 %v1972, %v2004
  %v2006 = vsub.f32 1.0, %v2005
  %v2007 = vmul.f32 %v2004, %v2006
  %v2008 = vadd.f32 %v2004, %v2007
  %vm2009 = vweird.f32 %v1972
  %vm2010 = vweird.f32 %v2004
  %vm2011 = vmor %vm2009, %vm2010
  %v2012 = vsel %vm2011, %v2004, %v2008
  %v2013 = vand.u32 2147483647, %v1972
  %vm2014 = vcmp.eq.f32.partialorder %v2013, 8.507059e+37
  %v2015 = vand.u32 %v1972, 2147483648
  %v2016 = vor.u32 1.1754944e-38, %v2015
  %v2017 = vsel %vm2014, %v2016, %v2012
  %v2018 = vmul.f32 1.0, %v2017
  %v2019 = vrcp.pop %v1973
  %v2020 = vmul.f32 %v1973, %v2019
  %v2021 = vsub.f32 1.0, %v2020
  %v2022 = vmul.f32 %v2019, %v2021
  %v2023 = vadd.f32 %v2019, %v2022
  %vm2024 = vweird.f32 %v1973
  %vm2025 = vweird.f32 %v2019
  %vm2026 = vmor %vm2024, %vm2025
  %v2027 = vsel %vm2026, %v2019, %v2023
  %v2028 = vand.u32 2147483647, %v1973
  %vm2029 = vcmp.eq.f32.partialorder %v2028, 8.507059e+37
  %v2030 = vand.u32 %v1973, 2147483648
  %v2031 = vor.u32 1.1754944e-38, %v2030
  %v2032 = vsel %vm2029, %v2031, %v2027
  %v2033 = vmul.f32 1.0, %v2032
  %v2034 = vrcp.pop %v1974
  %v2035 = vmul.f32 %v1974, %v2034
  %v2036 = vsub.f32 1.0, %v2035
  %v2037 = vmul.f32 %v2034, %v2036
  %v2038 = vadd.f32 %v2034, %v2037
  %vm2039 = vweird.f32 %v1974
  %vm2040 = vweird.f32 %v2034
  %vm2041 = vmor %vm2039, %vm2040
  %v2042 = vsel %vm2041, %v2034, %v2038
  %v2043 = vand.u32 2147483647, %v1974
  %vm2044 = vcmp.eq.f32.partialorder %v2043, 8.507059e+37
  %v2045 = vand.u32 %v1974, 2147483648
  %v2046 = vor.u32 1.1754944e-38, %v2045
  %v2047 = vsel %vm2044, %v2046, %v2042
  %v2048 = vmul.f32 1.0, %v2047
  %v2049 = vrcp.pop %v1975
  %v2050 = vmul.f32 %v1975, %v2049
  %v2051 = vsub.f32 1.0, %v2050
  %v2052 = vmul.f32 %v2049, %v2051
  %v2053 = vadd.f32 %v2049, %v2052
  %vm2054 = vweird.f32 %v1975
  %vm2055 = vweird.f32 %v2049
  %vm2056 = vmor %vm2054, %vm2055
  %v2057 = vsel %vm2056, %v2049, %v2053
  %v2058 = vand.u32 2147483647, %v1975
  %vm2059 = vcmp.eq.f32.partialorder %v2058, 8.507059e+37
  %v2060 = vand.u32 %v1975, 2147483648
  %v2061 = vor.u32 1.1754944e-38, %v2060
  %v2062 = vsel %vm2059, %v2061, %v2057
  %v2063 = vmul.f32 1.0, %v2062
  %v2064 = vrcp.pop %v1976
  %v2065 = vmul.f32 %v1976, %v2064
  %v2066 = vsub.f32 1.0, %v2065
  %v2067 = vmul.f32 %v2064, %v2066
  %v2068 = vadd.f32 %v2064, %v2067
  %vm2069 = vweird.f32 %v1976
  %vm2070 = vweird.f32 %v2064
  %vm2071 = vmor %vm2069, %vm2070
  %v2072 = vsel %vm2071, %v2064, %v2068
  %v2073 = vand.u32 2147483647, %v1976
  %vm2074 = vcmp.eq.f32.partialorder %v2073, 8.507059e+37
  %v2075 = vand.u32 %v1976, 2147483648
  %v2076 = vor.u32 1.1754944e-38, %v2075
  %v2077 = vsel %vm2074, %v2076, %v2072
  %v2078 = vmul.f32 1.0, %v2077
  %v2079 = vrcp.pop %v1977
  %v2080 = vmul.f32 %v1977, %v2079
  %v2081 = vsub.f32 1.0, %v2080
  %v2082 = vmul.f32 %v2079, %v2081
  %v2083 = vadd.f32 %v2079, %v2082
  %vm2084 = vweird.f32 %v1977
  %vm2085 = vweird.f32 %v2079
  %vm2086 = vmor %vm2084, %vm2085
  %v2087 = vsel %vm2086, %v2079, %v2083
  %v2088 = vand.u32 2147483647, %v1977
  %vm2089 = vcmp.eq.f32.partialorder %v2088, 8.507059e+37
  %v2090 = vand.u32 %v1977, 2147483648
  %v2091 = vor.u32 1.1754944e-38, %v2090
  %v2092 = vsel %vm2089, %v2091, %v2087
  %v2093 = vmul.f32 1.0, %v2092
  %v2094 = vrcp.pop %v1978
  %v2095 = vmul.f32 %v1978, %v2094
  %v2096 = vsub.f32 1.0, %v2095
  %v2097 = vmul.f32 %v2094, %v2096
  %v2098 = vadd.f32 %v2094, %v2097
  %vm2099 = vweird.f32 %v1978
  %vm2100 = vweird.f32 %v2094
  %vm2101 = vmor %vm2099, %vm2100
  %v2102 = vsel %vm2101, %v2094, %v2098
  %v2103 = vand.u32 2147483647, %v1978
  %vm2104 = vcmp.eq.f32.partialorder %v2103, 8.507059e+37
  %v2105 = vand.u32 %v1978, 2147483648
  %v2106 = vor.u32 1.1754944e-38, %v2105
  %v2107 = vsel %vm2104, %v2106, %v2102
  %v2108 = vmul.f32 1.0, %v2107
  %v2109 = vrcp.pop %v1979
  %v2110 = vmul.f32 %v1979, %v2109
  %v2111 = vsub.f32 1.0, %v2110
  %v2112 = vmul.f32 %v2109, %v2111
  %v2113 = vadd.f32 %v2109, %v2112
  %vm2114 = vweird.f32 %v1979
  %vm2115 = vweird.f32 %v2109
  %vm2116 = vmor %vm2114, %vm2115
  %v2117 = vsel %vm2116, %v2109, %v2113
  %v2118 = vand.u32 2147483647, %v1979
  %vm2119 = vcmp.eq.f32.partialorder %v2118, 8.507059e+37
  %v2120 = vand.u32 %v1979, 2147483648
  %v2121 = vor.u32 1.1754944e-38, %v2120
  %v2122 = vsel %vm2119, %v2121, %v2117
  %v2123 = vmul.f32 1.0, %v2122
  %v2124 = vrcp.pop %v1980
  %v2125 = vmul.f32 %v1980, %v2124
  %v2126 = vsub.f32 1.0, %v2125
  %v2127 = vmul.f32 %v2124, %v2126
  %v2128 = vadd.f32 %v2124, %v2127
  %vm2129 = vweird.f32 %v1980
  %vm2130 = vweird.f32 %v2124
  %vm2131 = vmor %vm2129, %vm2130
  %v2132 = vsel %vm2131, %v2124, %v2128
  %v2133 = vand.u32 2147483647, %v1980
  %vm2134 = vcmp.eq.f32.partialorder %v2133, 8.507059e+37
  %v2135 = vand.u32 %v1980, 2147483648
  %v2136 = vor.u32 1.1754944e-38, %v2135
  %v2137 = vsel %vm2134, %v2136, %v2132
  %v2138 = vmul.f32 1.0, %v2137
  %v2139 = vrcp.pop %v1981
  %v2140 = vmul.f32 %v1981, %v2139
  %v2141 = vsub.f32 1.0, %v2140
  %v2142 = vmul.f32 %v2139, %v2141
  %v2143 = vadd.f32 %v2139, %v2142
  %vm2144 = vweird.f32 %v1981
  %vm2145 = vweird.f32 %v2139
  %vm2146 = vmor %vm2144, %vm2145
  %v2147 = vsel %vm2146, %v2139, %v2143
  %v2148 = vand.u32 2147483647, %v1981
  %vm2149 = vcmp.eq.f32.partialorder %v2148, 8.507059e+37
  %v2150 = vand.u32 %v1981, 2147483648
  %v2151 = vor.u32 1.1754944e-38, %v2150
  %v2152 = vsel %vm2149, %v2151, %v2147
  %v2153 = vmul.f32 1.0, %v2152
  %v2154 = vrcp.pop %v1982
  %v2155 = vmul.f32 %v1982, %v2154
  %v2156 = vsub.f32 1.0, %v2155
  %v2157 = vmul.f32 %v2154, %v2156
  %v2158 = vadd.f32 %v2154, %v2157
  %vm2159 = vweird.f32 %v1982
  %vm2160 = vweird.f32 %v2154
  %vm2161 = vmor %vm2159, %vm2160
  %v2162 = vsel %vm2161, %v2154, %v2158
  %v2163 = vand.u32 2147483647, %v1982
  %vm2164 = vcmp.eq.f32.partialorder %v2163, 8.507059e+37
  %v2165 = vand.u32 %v1982, 2147483648
  %v2166 = vor.u32 1.1754944e-38, %v2165
  %v2167 = vsel %vm2164, %v2166, %v2162
  %v2168 = vmul.f32 1.0, %v2167
  %v2169 = vrcp.pop %v1983
  %v2170 = vmul.f32 %v1983, %v2169
  %v2171 = vsub.f32 1.0, %v2170
  %v2172 = vmul.f32 %v2169, %v2171
  %v2173 = vadd.f32 %v2169, %v2172
  %vm2174 = vweird.f32 %v1983
  %vm2175 = vweird.f32 %v2169
  %vm2176 = vmor %vm2174, %vm2175
  %v2177 = vsel %vm2176, %v2169, %v2173
  %v2178 = vand.u32 2147483647, %v1983
  %vm2179 = vcmp.eq.f32.partialorder %v2178, 8.507059e+37
  %v2180 = vand.u32 %v1983, 2147483648
  %v2181 = vor.u32 1.1754944e-38, %v2180
  %v2182 = vsel %vm2179, %v2181, %v2177
  %v2183 = vmul.f32 1.0, %v2182
  %v2184 = vrcp.pop %v1984
  %v2185 = vmul.f32 %v1984, %v2184
  %v2186 = vsub.f32 1.0, %v2185
  %v2187 = vmul.f32 %v2184, %v2186
  %v2188 = vadd.f32 %v2184, %v2187
  %vm2189 = vweird.f32 %v1984
  %vm2190 = vweird.f32 %v2184
  %vm2191 = vmor %vm2189, %vm2190
  %v2192 = vsel %vm2191, %v2184, %v2188
  %v2193 = vand.u32 2147483647, %v1984
  %vm2194 = vcmp.eq.f32.partialorder %v2193, 8.507059e+37
  %v2195 = vand.u32 %v1984, 2147483648
  %v2196 = vor.u32 1.1754944e-38, %v2195
  %v2197 = vsel %vm2194, %v2196, %v2192
  %v2198 = vmul.f32 1.0, %v2197
  %v2199 = vrcp.pop %v1985
  %v2200 = vmul.f32 %v1985, %v2199
  %v2201 = vsub.f32 1.0, %v2200
  %v2202 = vmul.f32 %v2199, %v2201
  %v2203 = vadd.f32 %v2199, %v2202
  %vm2204 = vweird.f32 %v1985
  %vm2205 = vweird.f32 %v2199
  %vm2206 = vmor %vm2204, %vm2205
  %v2207 = vsel %vm2206, %v2199, %v2203
  %v2208 = vand.u32 2147483647, %v1985
  %vm2209 = vcmp.eq.f32.partialorder %v2208, 8.507059e+37
  %v2210 = vand.u32 %v1985, 2147483648
  %v2211 = vor.u32 1.1754944e-38, %v2210
  %v2212 = vsel %vm2209, %v2211, %v2207
  %v2213 = vmul.f32 1.0, %v2212
  %v2214 = vrcp.pop %v1986
  %v2215 = vmul.f32 %v1986, %v2214
  %v2216 = vsub.f32 1.0, %v2215
  %v2217 = vmul.f32 %v2214, %v2216
  %v2218 = vadd.f32 %v2214, %v2217
  %vm2219 = vweird.f32 %v1986
  %vm2220 = vweird.f32 %v2214
  %vm2221 = vmor %vm2219, %vm2220
  %v2222 = vsel %vm2221, %v2214, %v2218
  %v2223 = vand.u32 2147483647, %v1986
  %vm2224 = vcmp.eq.f32.partialorder %v2223, 8.507059e+37
  %v2225 = vand.u32 %v1986, 2147483648
  %v2226 = vor.u32 1.1754944e-38, %v2225
  %v2227 = vsel %vm2224, %v2226, %v2222
  %v2228 = vmul.f32 1.0, %v2227
  %v2229 = vrcp.pop %v1987
  %v2230 = vmul.f32 %v1987, %v2229
  %v2231 = vsub.f32 1.0, %v2230
  %v2232 = vmul.f32 %v2229, %v2231
  %v2233 = vadd.f32 %v2229, %v2232
  %vm2234 = vweird.f32 %v1987
  %vm2235 = vweird.f32 %v2229
  %vm2236 = vmor %vm2234, %vm2235
  %v2237 = vsel %vm2236, %v2229, %v2233
  %v2238 = vand.u32 2147483647, %v1987
  %vm2239 = vcmp.eq.f32.partialorder %v2238, 8.507059e+37
  %v2240 = vand.u32 %v1987, 2147483648
  %v2241 = vor.u32 1.1754944e-38, %v2240
  %v2242 = vsel %vm2239, %v2241, %v2237
  %v2243 = vmul.f32 1.0, %v2242
  %v2244 = vrcp.pop %v1988
  %v2245 = vmul.f32 %v1988, %v2244
  %v2246 = vsub.f32 1.0, %v2245
  %v2247 = vmul.f32 %v2244, %v2246
  %v2248 = vadd.f32 %v2244, %v2247
  %vm2249 = vweird.f32 %v1988
  %vm2250 = vweird.f32 %v2244
  %vm2251 = vmor %vm2249, %vm2250
  %v2252 = vsel %vm2251, %v2244, %v2248
  %v2253 = vand.u32 2147483647, %v1988
  %vm2254 = vcmp.eq.f32.partialorder %v2253, 8.507059e+37
  %v2255 = vand.u32 %v1988, 2147483648
  %v2256 = vor.u32 1.1754944e-38, %v2255
  %v2257 = vsel %vm2254, %v2256, %v2252
  %v2258 = vmul.f32 1.0, %v2257
  %v2259 = vrcp.pop %v1989
  %v2260 = vmul.f32 %v1989, %v2259
  %v2261 = vsub.f32 1.0, %v2260
  %v2262 = vmul.f32 %v2259, %v2261
  %v2263 = vadd.f32 %v2259, %v2262
  %vm2264 = vweird.f32 %v1989
  %vm2265 = vweird.f32 %v2259
  %vm2266 = vmor %vm2264, %vm2265
  %v2267 = vsel %vm2266, %v2259, %v2263
  %v2268 = vand.u32 2147483647, %v1989
  %vm2269 = vcmp.eq.f32.partialorder %v2268, 8.507059e+37
  %v2270 = vand.u32 %v1989, 2147483648
  %v2271 = vor.u32 1.1754944e-38, %v2270
  %v2272 = vsel %vm2269, %v2271, %v2267
  %v2273 = vmul.f32 1.0, %v2272
  %v2274 = vrcp.pop %v1990
  %v2275 = vmul.f32 %v1990, %v2274
  %v2276 = vsub.f32 1.0, %v2275
  %v2277 = vmul.f32 %v2274, %v2276
  %v2278 = vadd.f32 %v2274, %v2277
  %vm2279 = vweird.f32 %v1990
  %vm2280 = vweird.f32 %v2274
  %vm2281 = vmor %vm2279, %vm2280
  %v2282 = vsel %vm2281, %v2274, %v2278
  %v2283 = vand.u32 2147483647, %v1990
  %vm2284 = vcmp.eq.f32.partialorder %v2283, 8.507059e+37
  %v2285 = vand.u32 %v1990, 2147483648
  %v2286 = vor.u32 1.1754944e-38, %v2285
  %v2287 = vsel %vm2284, %v2286, %v2282
  %v2288 = vmul.f32 1.0, %v2287
  %v2289 = vrcp.pop %v1991
  %v2290 = vmul.f32 %v1991, %v2289
  %v2291 = vsub.f32 1.0, %v2290
  %v2292 = vmul.f32 %v2289, %v2291
  %v2293 = vadd.f32 %v2289, %v2292
  %vm2294 = vweird.f32 %v1991
  %vm2295 = vweird.f32 %v2289
  %vm2296 = vmor %vm2294, %vm2295
  %v2297 = vsel %vm2296, %v2289, %v2293
  %v2298 = vand.u32 2147483647, %v1991
  %vm2299 = vcmp.eq.f32.partialorder %v2298, 8.507059e+37
  %v2300 = vand.u32 %v1991, 2147483648
  %v2301 = vor.u32 1.1754944e-38, %v2300
  %v2302 = vsel %vm2299, %v2301, %v2297
  %v2303 = vmul.f32 1.0, %v2302
  %v2304 = vrcp.pop %v1992
  %v2305 = vmul.f32 %v1992, %v2304
  %v2306 = vsub.f32 1.0, %v2305
  %v2307 = vmul.f32 %v2304, %v2306
  %v2308 = vadd.f32 %v2304, %v2307
  %vm2309 = vweird.f32 %v1992
  %vm2310 = vweird.f32 %v2304
  %vm2311 = vmor %vm2309, %vm2310
  %v2312 = vsel %vm2311, %v2304, %v2308
  %v2313 = vand.u32 2147483647, %v1992
  %vm2314 = vcmp.eq.f32.partialorder %v2313, 8.507059e+37
  %v2315 = vand.u32 %v1992, 2147483648
  %v2316 = vor.u32 1.1754944e-38, %v2315
  %v2317 = vsel %vm2314, %v2316, %v2312
  %v2318 = vmul.f32 1.0, %v2317
  %v2319 = vrcp.pop %v1993
  %v2320 = vmul.f32 %v1993, %v2319
  %v2321 = vsub.f32 1.0, %v2320
  %v2322 = vmul.f32 %v2319, %v2321
  %v2323 = vadd.f32 %v2319, %v2322
  %vm2324 = vweird.f32 %v1993
  %vm2325 = vweird.f32 %v2319
  %vm2326 = vmor %vm2324, %vm2325
  %v2327 = vsel %vm2326, %v2319, %v2323
  %v2328 = vand.u32 2147483647, %v1993
  %vm2329 = vcmp.eq.f32.partialorder %v2328, 8.507059e+37
  %v2330 = vand.u32 %v1993, 2147483648
  %v2331 = vor.u32 1.1754944e-38, %v2330
  %v2332 = vsel %vm2329, %v2331, %v2327
  %v2333 = vmul.f32 1.0, %v2332
  %v2334 = vrcp.pop %v1994
  %v2335 = vmul.f32 %v1994, %v2334
  %v2336 = vsub.f32 1.0, %v2335
  %v2337 = vmul.f32 %v2334, %v2336
  %v2338 = vadd.f32 %v2334, %v2337
  %vm2339 = vweird.f32 %v1994
  %vm2340 = vweird.f32 %v2334
  %vm2341 = vmor %vm2339, %vm2340
  %v2342 = vsel %vm2341, %v2334, %v2338
  %v2343 = vand.u32 2147483647, %v1994
  %vm2344 = vcmp.eq.f32.partialorder %v2343, 8.507059e+37
  %v2345 = vand.u32 %v1994, 2147483648
  %v2346 = vor.u32 1.1754944e-38, %v2345
  %v2347 = vsel %vm2344, %v2346, %v2342
  %v2348 = vmul.f32 1.0, %v2347
  %v2349 = vrcp.pop %v1995
  %v2350 = vmul.f32 %v1995, %v2349
  %v2351 = vsub.f32 1.0, %v2350
  %v2352 = vmul.f32 %v2349, %v2351
  %v2353 = vadd.f32 %v2349, %v2352
  %vm2354 = vweird.f32 %v1995
  %vm2355 = vweird.f32 %v2349
  %vm2356 = vmor %vm2354, %vm2355
  %v2357 = vsel %vm2356, %v2349, %v2353
  %v2358 = vand.u32 2147483647, %v1995
  %vm2359 = vcmp.eq.f32.partialorder %v2358, 8.507059e+37
  %v2360 = vand.u32 %v1995, 2147483648
  %v2361 = vor.u32 1.1754944e-38, %v2360
  %v2362 = vsel %vm2359, %v2361, %v2357
  %v2363 = vmul.f32 1.0, %v2362
  %v2364 = vrcp.pop %v1996
  %v2365 = vmul.f32 %v1996, %v2364
  %v2366 = vsub.f32 1.0, %v2365
  %v2367 = vmul.f32 %v2364, %v2366
  %v2368 = vadd.f32 %v2364, %v2367
  %vm2369 = vweird.f32 %v1996
  %vm2370 = vweird.f32 %v2364
  %vm2371 = vmor %vm2369, %vm2370
  %v2372 = vsel %vm2371, %v2364, %v2368
  %v2373 = vand.u32 2147483647, %v1996
  %vm2374 = vcmp.eq.f32.partialorder %v2373, 8.507059e+37
  %v2375 = vand.u32 %v1996, 2147483648
  %v2376 = vor.u32 1.1754944e-38, %v2375
  %v2377 = vsel %vm2374, %v2376, %v2372
  %v2378 = vmul.f32 1.0, %v2377
  %v2379 = vrcp.pop %v1997
  %v2380 = vmul.f32 %v1997, %v2379
  %v2381 = vsub.f32 1.0, %v2380
  %v2382 = vmul.f32 %v2379, %v2381
  %v2383 = vadd.f32 %v2379, %v2382
  %vm2384 = vweird.f32 %v1997
  %vm2385 = vweird.f32 %v2379
  %vm2386 = vmor %vm2384, %vm2385
  %v2387 = vsel %vm2386, %v2379, %v2383
  %v2388 = vand.u32 2147483647, %v1997
  %vm2389 = vcmp.eq.f32.partialorder %v2388, 8.507059e+37
  %v2390 = vand.u32 %v1997, 2147483648
  %v2391 = vor.u32 1.1754944e-38, %v2390
  %v2392 = vsel %vm2389, %v2391, %v2387
  %v2393 = vmul.f32 1.0, %v2392
  %v2394 = vrcp.pop %v1998
  %v2395 = vmul.f32 %v1998, %v2394
  %v2396 = vsub.f32 1.0, %v2395
  %v2397 = vmul.f32 %v2394, %v2396
  %v2398 = vadd.f32 %v2394, %v2397
  %vm2399 = vweird.f32 %v1998
  %vm2400 = vweird.f32 %v2394
  %vm2401 = vmor %vm2399, %vm2400
  %v2402 = vsel %vm2401, %v2394, %v2398
  %v2403 = vand.u32 2147483647, %v1998
  %vm2404 = vcmp.eq.f32.partialorder %v2403, 8.507059e+37
  %v2405 = vand.u32 %v1998, 2147483648
  %v2406 = vor.u32 1.1754944e-38, %v2405
  %v2407 = vsel %vm2404, %v2406, %v2402
  %v2408 = vmul.f32 1.0, %v2407
  %v2409 = vrcp.pop %v1999
  %v2410 = vmul.f32 %v1999, %v2409
  %v2411 = vsub.f32 1.0, %v2410
  %v2412 = vmul.f32 %v2409, %v2411
  %v2413 = vadd.f32 %v2409, %v2412
  %vm2414 = vweird.f32 %v1999
  %vm2415 = vweird.f32 %v2409
  %vm2416 = vmor %vm2414, %vm2415
  %v2417 = vsel %vm2416, %v2409, %v2413
  %v2418 = vand.u32 2147483647, %v1999
  %vm2419 = vcmp.eq.f32.partialorder %v2418, 8.507059e+37
  %v2420 = vand.u32 %v1999, 2147483648
  %v2421 = vor.u32 1.1754944e-38, %v2420
  %v2422 = vsel %vm2419, %v2421, %v2417
  %v2423 = vmul.f32 1.0, %v2422
  %v2424 = vrcp.pop %v2000
  %v2425 = vmul.f32 %v2000, %v2424
  %v2426 = vsub.f32 1.0, %v2425
  %v2427 = vmul.f32 %v2424, %v2426
  %v2428 = vadd.f32 %v2424, %v2427
  %vm2429 = vweird.f32 %v2000
  %vm2430 = vweird.f32 %v2424
  %vm2431 = vmor %vm2429, %vm2430
  %v2432 = vsel %vm2431, %v2424, %v2428
  %v2433 = vand.u32 2147483647, %v2000
  %vm2434 = vcmp.eq.f32.partialorder %v2433, 8.507059e+37
  %v2435 = vand.u32 %v2000, 2147483648
  %v2436 = vor.u32 1.1754944e-38, %v2435
  %v2437 = vsel %vm2434, %v2436, %v2432
  %v2438 = vmul.f32 1.0, %v2437
  %v2439 = vrcp.pop %v2001
  %v2440 = vmul.f32 %v2001, %v2439
  %v2441 = vsub.f32 1.0, %v2440
  %v2442 = vmul.f32 %v2439, %v2441
  %v2443 = vadd.f32 %v2439, %v2442
  %vm2444 = vweird.f32 %v2001
  %vm2445 = vweird.f32 %v2439
  %vm2446 = vmor %vm2444, %vm2445
  %v2447 = vsel %vm2446, %v2439, %v2443
  %v2448 = vand.u32 2147483647, %v2001
  %vm2449 = vcmp.eq.f32.partialorder %v2448, 8.507059e+37
  %v2450 = vand.u32 %v2001, 2147483648
  %v2451 = vor.u32 1.1754944e-38, %v2450
  %v2452 = vsel %vm2449, %v2451, %v2447
  %v2453 = vmul.f32 1.0, %v2452
  %v2454 = vrcp.pop %v2002
  %v2455 = vmul.f32 %v2002, %v2454
  %v2456 = vsub.f32 1.0, %v2455
  %v2457 = vmul.f32 %v2454, %v2456
  %v2458 = vadd.f32 %v2454, %v2457
  %vm2459 = vweird.f32 %v2002
  %vm2460 = vweird.f32 %v2454
  %vm2461 = vmor %vm2459, %vm2460
  %v2462 = vsel %vm2461, %v2454, %v2458
  %v2463 = vand.u32 2147483647, %v2002
  %vm2464 = vcmp.eq.f32.partialorder %v2463, 8.507059e+37
  %v2465 = vand.u32 %v2002, 2147483648
  %v2466 = vor.u32 1.1754944e-38, %v2465
  %v2467 = vsel %vm2464, %v2466, %v2462
  %v2468 = vmul.f32 1.0, %v2467
  %v2469 = vrcp.pop %v2003
  %v2470 = vmul.f32 %v2003, %v2469
  %v2471 = vsub.f32 1.0, %v2470
  %v2472 = vmul.f32 %v2469, %v2471
  %v2473 = vadd.f32 %v2469, %v2472
  %vm2474 = vweird.f32 %v2003
  %vm2475 = vweird.f32 %v2469
  %vm2476 = vmor %vm2474, %vm2475
  %v2477 = vsel %vm2476, %v2469, %v2473
  %v2478 = vand.u32 2147483647, %v2003
  %vm2479 = vcmp.eq.f32.partialorder %v2478, 8.507059e+37
  %v2480 = vand.u32 %v2003, 2147483648
  %v2481 = vor.u32 1.1754944e-38, %v2480
  %v2482 = vsel %vm2479, %v2481, %v2477
  %v2483 = vmul.f32 1.0, %v2482
  %2484 = vst.msk [vmem:[%s15] sm:$0xff] %vm197, %v2018
  %2485 = vst.msk [vmem:[%s15 + $0x8] sm:$0xff] %vm197, %v2033
  %2486 = vst.msk [vmem:[%s15 + $0x10] sm:$0xff] %vm197, %v2048
  %2487 = vst.msk [vmem:[%s15 + $0x18] sm:$0xff] %vm197, %v2063
  %2488 = vst.msk [vmem:[%s15 + $0x20] sm:$0xff] %vm197, %v2078
  %2489 = vst.msk [vmem:[%s15 + $0x28] sm:$0xff] %vm197, %v2093
  %2490 = vst.msk [vmem:[%s15 + $0x30] sm:$0xff] %vm197, %v2108
  %2491 = vst.msk [vmem:[%s15 + $0x38] sm:$0xff] %vm197, %v2123
  %2492 = vst.msk [vmem:[%s15 + $0x40] sm:$0xff] %vm197, %v2138
  %2493 = vst.msk [vmem:[%s15 + $0x48] sm:$0xff] %vm197, %v2153
  %2494 = vst.msk [vmem:[%s15 + $0x50] sm:$0xff] %vm197, %v2168
  %2495 = vst.msk [vmem:[%s15 + $0x58] sm:$0xff] %vm197, %v2183
  %2496 = vst.msk [vmem:[%s15 + $0x60] sm:$0xff] %vm197, %v2198
  %2497 = vst.msk [vmem:[%s15 + $0x68] sm:$0xff] %vm197, %v2213
  %2498 = vst.msk [vmem:[%s15 + $0x70] sm:$0xff] %vm197, %v2228
  %2499 = vst.msk [vmem:[%s15 + $0x78] sm:$0xff] %vm197, %v2243
  %2500 = vst.msk [vmem:[%s15 + $0x80] sm:$0xff] %vm197, %v2258
  %2501 = vst.msk [vmem:[%s15 + $0x88] sm:$0xff] %vm197, %v2273
  %2502 = vst.msk [vmem:[%s15 + $0x90] sm:$0xff] %vm197, %v2288
  %2503 = vst.msk [vmem:[%s15 + $0x98] sm:$0xff] %vm197, %v2303
  %2504 = vst.msk [vmem:[%s15 + $0xa0] sm:$0xff] %vm197, %v2318
  %2505 = vst.msk [vmem:[%s15 + $0xa8] sm:$0xff] %vm197, %v2333
  %2506 = vst.msk [vmem:[%s15 + $0xb0] sm:$0xff] %vm197, %v2348
  %2507 = vst.msk [vmem:[%s15 + $0xb8] sm:$0xff] %vm197, %v2363
  %2508 = vst.msk [vmem:[%s15 + $0xc0] sm:$0xff] %vm197, %v2378
  %2509 = vst.msk [vmem:[%s15 + $0xc8] sm:$0xff] %vm197, %v2393
  %2510 = vst.msk [vmem:[%s15 + $0xd0] sm:$0xff] %vm197, %v2408
  %2511 = vst.msk [vmem:[%s15 + $0xd8] sm:$0xff] %vm197, %v2423
  %2512 = vst.msk [vmem:[%s15 + $0xe0] sm:$0xff] %vm197, %v2438
  %2513 = vst.msk [vmem:[%s15 + $0xe8] sm:$0xff] %vm197, %v2453
  %2514 = vst.msk [vmem:[%s15 + $0xf0] sm:$0xff] %vm197, %v2468
  %2515 = vst.msk [vmem:[%s15 + $0xf8] sm:$0xff] %vm197, %v2483
  // Predicated region
  $region62: #{tpu_custom_call.1} parent=0 // pred_check
    _
  $region63: #{tpu_custom_call.1} parent=0 // pred_check_branch
    %2517 = sbr.rel (0) target = $region65
  $region64: #{tpu_custom_call.1} parent=0 // pred_region
    _
  $region65: #{tpu_custom_call.1} parent=0 // pred_fallthru
    _
  // Predicated region
  $region66: #{tpu_custom_call.1} parent=0 // pred_check
    _
  $region67: #{tpu_custom_call.1} parent=0 // pred_check_branch
    %2519 = sbr.rel (0) target = $region69
  $region68: #{tpu_custom_call.1} parent=0 // pred_region
    _
  $region69: #{tpu_custom_call.1} parent=0 // pred_fallthru
    _

</llo_original>
